<compile_context>
chip_gen: v7x
topology: tpu7x:2x2x1
jax: 0.10.0
libtpu: 0.0.40
codegen_flags: <defaults>
</compile_context>

<pallas_src>
import functools
import math

import jax
import jax.numpy as jnp
import numpy as np
from jax.experimental import pallas as pl
from jax.experimental.pallas import tpu as pltpu

NEG_INF = -1e30  # finite mask sentinel (self-correcting in online softmax)


# ----------------------------------------------------------------------------
# Kernel A: LayerNorm1 + fused QKV projection, head-major outputs.
# ----------------------------------------------------------------------------
def qkv_kernel(x_ref, ln1w_ref, ln1b_ref, wqkv_ref, bqkv_ref,
               q_ref, k_ref, v_ref, *, eps, scale, num_heads, head_dim):
    x = x_ref[0]                                           # (TL, C) f32
    mu = jnp.mean(x, axis=-1, keepdims=True)
    var = jnp.mean((x - mu) ** 2, axis=-1, keepdims=True)
    h = (x - mu) * jax.lax.rsqrt(var + eps) * ln1w_ref[...] + ln1b_ref[...]
    hb = h.astype(jnp.bfloat16)

    # One wide (TL, C) @ (C, 3C) MXU matmul instead of three projections.
    qkv = jnp.dot(hb, wqkv_ref[...],
                  preferred_element_type=jnp.float32) + bqkv_ref[...]
    C = x.shape[-1]
    q = (qkv[:, :C] * scale).astype(jnp.bfloat16)          # fold 1/sqrt(d) into q
    k = qkv[:, C:2 * C].astype(jnp.bfloat16)
    v = qkv[:, 2 * C:].astype(jnp.bfloat16)

    # Head-major stores (static lane slices) -> no XLA transpose round trip.
    for hh in range(num_heads):
        lo = hh * head_dim
        hi = lo + head_dim
        q_ref[0, hh] = q[:, lo:hi]
        k_ref[0, hh] = k[:, lo:hi]
        v_ref[0, hh] = v[:, lo:hi]


# ----------------------------------------------------------------------------
# Kernel B: flash attention (KV streamed over the last grid axis) + fused
# output projection + residual + LayerNorm2 + FFN + residual.
# ----------------------------------------------------------------------------
def attn_ffn_kernel(x_ref, q_ref, k_ref, v_ref, kbias_ref,
                    wo_ref, bo_ref, ln2w_ref, ln2b_ref,
                    w1_ref, b1_ref, w2_ref, b2_ref,
                    o_ref,
                    m_sc, l_sc, acc_sc, ctx_sc,
                    *, eps, causal, bf16_exp, num_heads, head_dim, tl, tkv):
    i = pl.program_id(1)
    kv = pl.program_id(2)
    nkv = pl.num_programs(2)

    @pl.when(kv == 0)
    def _init():
        m_sc[...] = jnp.full((num_heads, tl, 1), NEG_INF, jnp.float32)
        l_sc[...] = jnp.zeros((num_heads, tl, 1), jnp.float32)
        acc_sc[...] = jnp.zeros((num_heads, tl, head_dim), jnp.float32)

    def accumulate():
        q = q_ref[0]                                       # (H, TL, d) bf16 (pre-scaled)
        k = k_ref[0]                                       # (H, TKV, d) bf16
        v = v_ref[0]                                       # (H, TKV, d) bf16

        s = jnp.einsum('hqd,hkd->hqk', q, k,
                       preferred_element_type=jnp.float32)  # (H, TL, TKV) f32

        kb = kbias_ref[0]                                  # (1, TKV) key-padding bias
        if causal:
            row = i * tl + jax.lax.broadcasted_iota(jnp.int32, (tl, tkv), 0)
            col = kv * tkv + jax.lax.broadcasted_iota(jnp.int32, (tl, tkv), 1)
            bias = jnp.where(col <= row, 0.0, NEG_INF) + kb  # (TL, TKV)
        else:
            bias = jnp.broadcast_to(kb, (tl, tkv))
        s = s + bias[jnp.newaxis]

        m_prev = m_sc[...]
        m_new = jnp.maximum(m_prev, jnp.max(s, axis=-1, keepdims=True))
        alpha = jnp.exp(m_prev - m_new)                    # f32 rescale factor
        if bf16_exp:
            # v6e/v7x: bf16 EUP ~2x f32 throughput; p <= 1 so bf16 is ample.
            p = jnp.exp((s - m_new).astype(jnp.bfloat16))
            p_sum = jnp.sum(p.astype(jnp.float32), axis=-1, keepdims=True)
            p_mm = p
        else:
            p = jnp.exp(s - m_new)
            p_sum = jnp.sum(p, axis=-1, keepdims=True)
            p_mm = p.astype(jnp.bfloat16)
        l_sc[...] = alpha * l_sc[...] + p_sum
        acc_sc[...] = alpha * acc_sc[...] + jnp.einsum(
            'hqk,hkd->hqd', p_mm, v, preferred_element_type=jnp.float32)
        m_sc[...] = m_new

    if causal:
        # Skip KV blocks entirely in the future of this q tile.
        pl.when(kv * tkv <= i * tl + (tl - 1))(accumulate)
    else:
        accumulate()

    @pl.when(kv == nkv - 1)
    def _finalize():
        # Merge heads in VMEM, then ONE depth-C output-projection matmul.
        for hh in range(num_heads):
            inv = pl.reciprocal(l_sc[hh], approx=True)      # (TL, 1)
            ctx_sc[:, hh * head_dim:(hh + 1) * head_dim] = (
                acc_sc[hh] * inv).astype(jnp.bfloat16)
        o = jnp.dot(ctx_sc[...], wo_ref[...],
                    preferred_element_type=jnp.float32) + bo_ref[...]
        x = x_ref[0] + o                                    # residual (dropout = id)

        mu = jnp.mean(x, axis=-1, keepdims=True)
        var = jnp.mean((x - mu) ** 2, axis=-1, keepdims=True)
        h2 = (x - mu) * jax.lax.rsqrt(var + eps) * ln2w_ref[...] + ln2b_ref[...]

        f = jnp.dot(h2.astype(jnp.bfloat16), w1_ref[...],
                    preferred_element_type=jnp.float32) + b1_ref[...]
        f = f * 0.5 * (1.0 + jax.lax.erf(f * (1.0 / math.sqrt(2.0))))
        f = jnp.dot(f.astype(jnp.bfloat16), w2_ref[...],
                    preferred_element_type=jnp.float32) + b2_ref[...]

        o_ref[0] = (x + f).astype(o_ref.dtype)              # residual (dropout = id)


# ----------------------------------------------------------------------------
# Wrapper
# ----------------------------------------------------------------------------
def attention_block(x, key_valid, params, num_heads, *, causal=True,
                    seq_tile=128, kv_tile=128, eps=1e-5,
                    bf16_exp=None, vmem_limit_bytes=None):
    """One XGLM AttentionBlock forward (eval mode).

    x:         [B, L, C] f32.
    key_valid: [B, L] (nonzero = key attendable) or None.  Combined with the
               in-kernel causal mask this reproduces XGLM's attn_mask*padding.
    """
    B, L, C = x.shape
    assert C % num_heads == 0
    hd = C // num_heads
    tl = min(seq_tile, L)
    tkv = min(kv_tile, L)
    assert L % tl == 0 and L % tkv == 0
    assert C % 128 == 0, "C must be lane-aligned for the fused QKV slicing"
    bf16 = jnp.bfloat16

    kind = jax.devices()[0].device_kind.lower()
    if bf16_exp is None:                       # bf16 EUP path only on v6e/v7x
        bf16_exp = any(t in kind for t in ('v6', 'v7', 'tpu7', '7x'))
    if vmem_limit_bytes is None:               # raise v5e's 16 MiB default
        is_v7 = any(t in kind for t in ('v7', 'tpu7', '7x'))
        vmem_limit_bytes = (48 if is_v7 else 64) * 1024 * 1024

    # bf16 weights for the MXU; biases / LN params stay f32.
    wqkv = jnp.concatenate([params['wq'], params['wk'], params['wv']],
                           axis=1).astype(bf16)             # (C, 3C)
    bqkv = jnp.concatenate([params['bq'], params['bk'], params['bv']], axis=1)
    wo = params['wo'].astype(bf16)
    w1 = params['w1'].astype(bf16)
    w2 = params['w2'].astype(bf16)

    # Tiny (B, 1, L) additive key-padding bias instead of a (B, L, L) mask DMA.
    if key_valid is None:
        kbias = jnp.zeros((B, 1, L), jnp.float32)
    else:
        kbias = jnp.where(key_valid.reshape(B, 1, L) != 0, 0.0,
                          NEG_INF).astype(jnp.float32)

    # ---- kernel A: LN1 + fused QKV, head-major outputs ----
    a_consts = [params['ln1_w'], params['ln1_b'], wqkv, bqkv]
    rep2 = lambda p: pl.BlockSpec(p.shape, lambda b, i, _n=p.ndim: (0,) * _n)
    qkv_shape = jax.ShapeDtypeStruct((B, num_heads, L, hd), bf16)
    q, k, v = pl.pallas_call(
        functools.partial(qkv_kernel, eps=eps, scale=1.0 / math.sqrt(hd),
                          num_heads=num_heads, head_dim=hd),
        out_shape=(qkv_shape, qkv_shape, qkv_shape),
        grid=(B, L // tl),
        in_specs=[pl.BlockSpec((1, tl, C), lambda b, i: (b, i, 0))]
                 + [rep2(p) for p in a_consts],
        out_specs=tuple(
            pl.BlockSpec((1, num_heads, tl, hd), lambda b, i: (b, 0, i, 0))
            for _ in range(3)),
        compiler_params=pltpu.CompilerParams(
            dimension_semantics=("parallel", "parallel"),
            vmem_limit_bytes=vmem_limit_bytes),
    )(x, *a_consts)

    # ---- kernel B: flash attention + out-proj + LN2 + FFN ----
    b_consts = [wo, params['bo'], params['ln2_w'], params['ln2_b'],
                w1, params['b1'], w2, params['b2']]
    rep3 = lambda p: pl.BlockSpec(p.shape,
                                  lambda b, i, kv, _n=p.ndim: (0,) * _n)
    out = pl.pallas_call(
        functools.partial(attn_ffn_kernel, eps=eps, causal=causal,
                          bf16_exp=bf16_exp, num_heads=num_heads,
                          head_dim=hd, tl=tl, tkv=tkv),
        out_shape=jax.ShapeDtypeStruct((B, L, C), x.dtype),
        grid=(B, L // tl, L // tkv),
        in_specs=[
            pl.BlockSpec((1, tl, C), lambda b, i, kv: (b, i, 0)),              # x
            pl.BlockSpec((1, num_heads, tl, hd), lambda b, i, kv: (b, 0, i, 0)),   # q
            pl.BlockSpec((1, num_heads, tkv, hd), lambda b, i, kv: (b, 0, kv, 0)),  # k blk
            pl.BlockSpec((1, num_heads, tkv, hd), lambda b, i, kv: (b, 0, kv, 0)),  # v blk
            pl.BlockSpec((1, 1, tkv), lambda b, i, kv: (b, 0, kv)),            # key bias
        ] + [rep3(p) for p in b_consts],
        out_specs=pl.BlockSpec((1, tl, C), lambda b, i, kv: (b, i, 0)),
        scratch_shapes=[pltpu.VMEM((num_heads, tl, 1), jnp.float32),   # m
                        pltpu.VMEM((num_heads, tl, 1), jnp.float32),   # l
                        pltpu.VMEM((num_heads, tl, hd), jnp.float32),  # acc
                        pltpu.VMEM((tl, C), bf16)],                    # merged ctx
        compiler_params=pltpu.CompilerParams(
            dimension_semantics=("parallel", "parallel", "arbitrary"),
            vmem_limit_bytes=vmem_limit_bytes),
    )(x, q, k, v, kbias, *b_consts)
    return out


# ----------------------------------------------------------------------------
# Pure-JAX reference (mirrors the PyTorch forward, eval mode, f32 throughout)
# ----------------------------------------------------------------------------
def reference(x, key_valid, params, num_heads, causal=True):
    eps = 1e-5
    B, L, C = x.shape
    hd = C // num_heads

    def ln(y, w, b):
        mu = y.mean(-1, keepdims=True)
        var = ((y - mu) ** 2).mean(-1, keepdims=True)
        return (y - mu) / jnp.sqrt(var + eps) * w + b

    mask = jnp.ones((L, L), jnp.float32)
    if causal:
        mask = jnp.tril(mask)
    mask = jnp.broadcast_to(mask[None], (B, L, L))
    if key_valid is not None:
        mask = mask * (key_valid != 0).astype(jnp.float32)[:, None, :]

    h = ln(x, params['ln1_w'], params['ln1_b'])
    q = (h @ params['wq'] + params['bq']).reshape(B, L, num_heads, hd)
    k = (h @ params['wk'] + params['bk']).reshape(B, L, num_heads, hd)
    v = (h @ params['wv'] + params['bv']).reshape(B, L, num_heads, hd)
    attn = (1.0 / math.sqrt(hd)) * jnp.einsum('binc,bjnc->bnij', q, k)
    attn = jnp.where(mask[:, None, :, :] == 0, -jnp.inf, attn)
    attn = jax.nn.softmax(attn, axis=-1)
    o = jnp.einsum('bnij,bjnc->binc', attn, v).reshape(B, L, C)
    o = o @ params['wo'] + params['bo']
    x = x + o
    h2 = ln(x, params['ln2_w'], params['ln2_b'])
    f = h2 @ params['w1'] + params['b1']
    f = f * 0.5 * (1.0 + jax.lax.erf(f / math.sqrt(2.0)))
    f = f @ params['w2'] + params['b2']
    return x + f


def make_params(key, dim, ffn_dim):
    ks = jax.random.split(key, 6)
    s = 0.02
    return {
        'ln1_w': jnp.ones((1, dim), jnp.float32),
        'ln1_b': jnp.zeros((1, dim), jnp.float32),
        'wq': s * jax.random.normal(ks[0], (dim, dim), jnp.float32),
        'bq': jnp.zeros((1, dim), jnp.float32),
        'wk': s * jax.random.normal(ks[1], (dim, dim), jnp.float32),
        'bk': jnp.zeros((1, dim), jnp.float32),
        'wv': s * jax.random.normal(ks[2], (dim, dim), jnp.float32),
        'bv': jnp.zeros((1, dim), jnp.float32),
        'wo': s * jax.random.normal(ks[3], (dim, dim), jnp.float32),
        'bo': jnp.zeros((1, dim), jnp.float32),
        'ln2_w': jnp.ones((1, dim), jnp.float32),
        'ln2_b': jnp.zeros((1, dim), jnp.float32),
        'w1': s * jax.random.normal(ks[4], (dim, ffn_dim), jnp.float32),
        'b1': jnp.zeros((1, ffn_dim), jnp.float32),
        'w2': s * jax.random.normal(ks[5], (ffn_dim, dim), jnp.float32),
        'b2': jnp.zeros((1, dim), jnp.float32),
    }


if __name__ == "__main__":
    # Small but MXU/lane-friendly config: two 128-row q tiles and two 128-row
    # KV blocks (exercises the online-softmax streaming and the causal block
    # skip); C is a multiple of 128 so all stores stay lane-aligned.
    B, L, dim, ffn_dim, num_heads = 2, 256, 256, 512, 4

    key = jax.random.PRNGKey(0)
    kx, kp = jax.random.split(key)
    x = jax.random.normal(kx, (B, L, dim), jnp.float32)
    # key padding mask (XGLM style): last 32 keys of batch element 1 are pads.
    key_valid = jnp.ones((B, L), jnp.int32).at[1, L - 32:].set(0)
    params = make_params(kp, dim, ffn_dim)

    out = attention_block(x, key_valid, params, num_heads)
    out = jax.block_until_ready(out)

    ref = jax.block_until_ready(reference(x, key_valid, params, num_heads))
    # bf16 MXU matmuls + bf16 exp (on v6e/v7x) + approx reciprocal -> looser
    # tolerance than an all-f32 comparison.
    np.testing.assert_allclose(np.asarray(out), np.asarray(ref),
                               rtol=2e-2, atol=2e-2)
    print("KERNEL_OK")
</pallas_src>

<mosaic_0001>
module attributes {stable_mosaic.version = 11 : i64} {
  func.func @qkv_kernel(%arg0: i32, %arg1: i32, %arg2: memref<1x128x256xf32, #tpu.memory_space<vmem>>, %arg3: memref<1x256xf32, #tpu.memory_space<vmem>>, %arg4: memref<1x256xf32, #tpu.memory_space<vmem>>, %arg5: memref<256x768xbf16, #tpu.memory_space<vmem>>, %arg6: memref<1x768xf32, #tpu.memory_space<vmem>>, %arg7: memref<1x4x128x64xbf16, #tpu.memory_space<vmem>>, %arg8: memref<1x4x128x64xbf16, #tpu.memory_space<vmem>>, %arg9: memref<1x4x128x64xbf16, #tpu.memory_space<vmem>>) attributes {dimension_semantics = [#tpu.dimension_semantics<parallel>, #tpu.dimension_semantics<parallel>], iteration_bounds = array<i64: 2, 2>, scalar_prefetch = 0 : i64, scratch_operands = 0 : i64, tpu.core_type = #tpu.core_type<tc>, window_params = [{transform_indices = @transform_0, window_bounds = array<i64: 1, 128, 256>}, {pipeline_mode = #tpu.pipeline_mode<synchronous>, transform_indices = @transform_1, window_bounds = array<i64: 1, 256>}, {pipeline_mode = #tpu.pipeline_mode<synchronous>, transform_indices = @transform_2, window_bounds = array<i64: 1, 256>}, {pipeline_mode = #tpu.pipeline_mode<synchronous>, transform_indices = @transform_3, window_bounds = array<i64: 256, 768>}, {pipeline_mode = #tpu.pipeline_mode<synchronous>, transform_indices = @transform_4, window_bounds = array<i64: 1, 768>}, {transform_indices = @transform_5, window_bounds = array<i64: 1, 4, 128, 64>}, {transform_indices = @transform_6, window_bounds = array<i64: 1, 4, 128, 64>}, {transform_indices = @transform_7, window_bounds = array<i64: 1, 4, 128, 64>}]} {
    %c0 = arith.constant 0 : index
    %c0_0 = arith.constant 0 : index
    %c0_1 = arith.constant 0 : index
    %0 = vector.load %arg2[%c0, %c0_0, %c0_1] : memref<1x128x256xf32, #tpu.memory_space<vmem>>, vector<1x128x256xf32>
    %1 = vector.shape_cast %0 : vector<1x128x256xf32> to vector<128x256xf32>
    %cst = arith.constant dense<0.000000e+00> : vector<128xf32>
    %2 = vector.multi_reduction <add>, %1, %cst [1] : vector<128x256xf32> to vector<128xf32>
    %3 = vector.shape_cast %2 : vector<128xf32> to vector<128x1xf32>
    %cst_2 = arith.constant 2.560000e+02 : f32
    %4 = vector.broadcast %cst_2 : f32 to vector<128x1xf32>
    %5 = arith.divf %3, %4 : vector<128x1xf32>
    %6 = vector.broadcast %5 : vector<128x1xf32> to vector<128x256xf32>
    %7 = arith.subf %1, %6 : vector<128x256xf32>
    %8 = arith.mulf %7, %7 : vector<128x256xf32>
    %cst_3 = arith.constant dense<0.000000e+00> : vector<128xf32>
    %9 = vector.multi_reduction <add>, %8, %cst_3 [1] : vector<128x256xf32> to vector<128xf32>
    %10 = vector.shape_cast %9 : vector<128xf32> to vector<128x1xf32>
    %cst_4 = arith.constant 2.560000e+02 : f32
    %11 = vector.broadcast %cst_4 : f32 to vector<128x1xf32>
    %12 = arith.divf %10, %11 : vector<128x1xf32>
    %13 = vector.broadcast %5 : vector<128x1xf32> to vector<128x256xf32>
    %14 = arith.subf %1, %13 : vector<128x256xf32>
    %cst_5 = arith.constant 9.99999974E-6 : f32
    %15 = vector.broadcast %cst_5 : f32 to vector<128x1xf32>
    %16 = arith.addf %12, %15 : vector<128x1xf32>
    %17 = math.rsqrt %16 : vector<128x1xf32>
    %18 = vector.broadcast %17 : vector<128x1xf32> to vector<128x256xf32>
    %19 = arith.mulf %14, %18 : vector<128x256xf32>
    %c0_6 = arith.constant 0 : index
    %c0_7 = arith.constant 0 : index
    %20 = vector.load %arg3[%c0_6, %c0_7] : memref<1x256xf32, #tpu.memory_space<vmem>>, vector<1x256xf32>
    %21 = vector.broadcast %20 : vector<1x256xf32> to vector<128x256xf32>
    %22 = arith.mulf %19, %21 : vector<128x256xf32>
    %c0_8 = arith.constant 0 : index
    %c0_9 = arith.constant 0 : index
    %23 = vector.load %arg4[%c0_8, %c0_9] : memref<1x256xf32, #tpu.memory_space<vmem>>, vector<1x256xf32>
    %24 = vector.broadcast %23 : vector<1x256xf32> to vector<128x256xf32>
    %25 = arith.addf %22, %24 : vector<128x256xf32>
    %26 = arith.truncf %25 : vector<128x256xf32> to vector<128x256xbf16>
    %c0_10 = arith.constant 0 : index
    %c0_11 = arith.constant 0 : index
    %27 = vector.load %arg5[%c0_10, %c0_11] : memref<256x768xbf16, #tpu.memory_space<vmem>>, vector<256x768xbf16>
    %cst_12 = arith.constant dense<0.000000e+00> : vector<128x768xf32>
    %28 = tpu.matmul %26, %27, %cst_12 {dimension_numbers = #tpu.dot_dimension_numbers<[1], [0], [0], [1], [0, 0, 1, 1], [], []>} : vector<128x256xbf16>, vector<256x768xbf16>, vector<128x768xf32> -> vector<128x768xf32>
    %c0_13 = arith.constant 0 : index
    %c0_14 = arith.constant 0 : index
    %29 = vector.load %arg6[%c0_13, %c0_14] : memref<1x768xf32, #tpu.memory_space<vmem>>, vector<1x768xf32>
    %30 = vector.broadcast %29 : vector<1x768xf32> to vector<128x768xf32>
    %31 = arith.addf %28, %30 : vector<128x768xf32>
    %32 = vector.extract_strided_slice %31 {offsets = [0, 0], sizes = [128, 256], strides = [1, 1]} : vector<128x768xf32> to vector<128x256xf32>
    %cst_15 = arith.constant 1.250000e-01 : f32
    %33 = vector.broadcast %cst_15 : f32 to vector<128x256xf32>
    %34 = arith.mulf %32, %33 : vector<128x256xf32>
    %35 = arith.truncf %34 : vector<128x256xf32> to vector<128x256xbf16>
    %36 = vector.extract_strided_slice %31 {offsets = [0, 256], sizes = [128, 256], strides = [1, 1]} : vector<128x768xf32> to vector<128x256xf32>
    %37 = arith.truncf %36 : vector<128x256xf32> to vector<128x256xbf16>
    %38 = vector.extract_strided_slice %31 {offsets = [0, 512], sizes = [128, 256], strides = [1, 1]} : vector<128x768xf32> to vector<128x256xf32>
    %39 = arith.truncf %38 : vector<128x256xf32> to vector<128x256xbf16>
    %40 = vector.extract_strided_slice %35 {offsets = [0, 0], sizes = [128, 64], strides = [1, 1]} : vector<128x256xbf16> to vector<128x64xbf16>
    %c0_16 = arith.constant 0 : index
    %c0_17 = arith.constant 0 : index
    %c0_18 = arith.constant 0 : index
    %c0_19 = arith.constant 0 : index
    %41 = vector.load %arg7[%c0_16, %c0_17, %c0_18, %c0_19] : memref<1x4x128x64xbf16, #tpu.memory_space<vmem>>, vector<1x1x128x64xbf16>
    %42 = vector.shape_cast %41 : vector<1x1x128x64xbf16> to vector<128x64xbf16>
    %43 = vector.shape_cast %40 : vector<128x64xbf16> to vector<1x1x128x64xbf16>
    tpu.vector_store %arg7[%c0_16, %c0_17, %c0_18, %c0_19], %43 {strides = array<i32>} : memref<1x4x128x64xbf16, #tpu.memory_space<vmem>>, vector<1x1x128x64xbf16>,
    %44 = vector.extract_strided_slice %37 {offsets = [0, 0], sizes = [128, 64], strides = [1, 1]} : vector<128x256xbf16> to vector<128x64xbf16>
    %c0_20 = arith.constant 0 : index
    %c0_21 = arith.constant 0 : index
    %c0_22 = arith.constant 0 : index
    %c0_23 = arith.constant 0 : index
    %45 = vector.load %arg8[%c0_20, %c0_21, %c0_22, %c0_23] : memref<1x4x128x64xbf16, #tpu.memory_space<vmem>>, vector<1x1x128x64xbf16>
    %46 = vector.shape_cast %45 : vector<1x1x128x64xbf16> to vector<128x64xbf16>
    %47 = vector.shape_cast %44 : vector<128x64xbf16> to vector<1x1x128x64xbf16>
    tpu.vector_store %arg8[%c0_20, %c0_21, %c0_22, %c0_23], %47 {strides = array<i32>} : memref<1x4x128x64xbf16, #tpu.memory_space<vmem>>, vector<1x1x128x64xbf16>,
    %48 = vector.extract_strided_slice %39 {offsets = [0, 0], sizes = [128, 64], strides = [1, 1]} : vector<128x256xbf16> to vector<128x64xbf16>
    %c0_24 = arith.constant 0 : index
    %c0_25 = arith.constant 0 : index
    %c0_26 = arith.constant 0 : index
    %c0_27 = arith.constant 0 : index
    %49 = vector.load %arg9[%c0_24, %c0_25, %c0_26, %c0_27] : memref<1x4x128x64xbf16, #tpu.memory_space<vmem>>, vector<1x1x128x64xbf16>
    %50 = vector.shape_cast %49 : vector<1x1x128x64xbf16> to vector<128x64xbf16>
    %51 = vector.shape_cast %48 : vector<128x64xbf16> to vector<1x1x128x64xbf16>
    tpu.vector_store %arg9[%c0_24, %c0_25, %c0_26, %c0_27], %51 {strides = array<i32>} : memref<1x4x128x64xbf16, #tpu.memory_space<vmem>>, vector<1x1x128x64xbf16>,
    %52 = vector.extract_strided_slice %35 {offsets = [0, 64], sizes = [128, 64], strides = [1, 1]} : vector<128x256xbf16> to vector<128x64xbf16>
    %c0_28 = arith.constant 0 : index
    %c1 = arith.constant 1 : index
    %c0_29 = arith.constant 0 : index
    %c0_30 = arith.constant 0 : index
    %53 = vector.load %arg7[%c0_28, %c1, %c0_29, %c0_30] : memref<1x4x128x64xbf16, #tpu.memory_space<vmem>>, vector<1x1x128x64xbf16>
    %54 = vector.shape_cast %53 : vector<1x1x128x64xbf16> to vector<128x64xbf16>
    %55 = vector.shape_cast %52 : vector<128x64xbf16> to vector<1x1x128x64xbf16>
    tpu.vector_store %arg7[%c0_28, %c1, %c0_29, %c0_30], %55 {strides = array<i32>} : memref<1x4x128x64xbf16, #tpu.memory_space<vmem>>, vector<1x1x128x64xbf16>,
    %56 = vector.extract_strided_slice %37 {offsets = [0, 64], sizes = [128, 64], strides = [1, 1]} : vector<128x256xbf16> to vector<128x64xbf16>
    %c0_31 = arith.constant 0 : index
    %c1_32 = arith.constant 1 : index
    %c0_33 = arith.constant 0 : index
    %c0_34 = arith.constant 0 : index
    %57 = vector.load %arg8[%c0_31, %c1_32, %c0_33, %c0_34] : memref<1x4x128x64xbf16, #tpu.memory_space<vmem>>, vector<1x1x128x64xbf16>
    %58 = vector.shape_cast %57 : vector<1x1x128x64xbf16> to vector<128x64xbf16>
    %59 = vector.shape_cast %56 : vector<128x64xbf16> to vector<1x1x128x64xbf16>
    tpu.vector_store %arg8[%c0_31, %c1_32, %c0_33, %c0_34], %59 {strides = array<i32>} : memref<1x4x128x64xbf16, #tpu.memory_space<vmem>>, vector<1x1x128x64xbf16>,
    %60 = vector.extract_strided_slice %39 {offsets = [0, 64], sizes = [128, 64], strides = [1, 1]} : vector<128x256xbf16> to vector<128x64xbf16>
    %c0_35 = arith.constant 0 : index
    %c1_36 = arith.constant 1 : index
    %c0_37 = arith.constant 0 : index
    %c0_38 = arith.constant 0 : index
    %61 = vector.load %arg9[%c0_35, %c1_36, %c0_37, %c0_38] : memref<1x4x128x64xbf16, #tpu.memory_space<vmem>>, vector<1x1x128x64xbf16>
    %62 = vector.shape_cast %61 : vector<1x1x128x64xbf16> to vector<128x64xbf16>
    %63 = vector.shape_cast %60 : vector<128x64xbf16> to vector<1x1x128x64xbf16>
    tpu.vector_store %arg9[%c0_35, %c1_36, %c0_37, %c0_38], %63 {strides = array<i32>} : memref<1x4x128x64xbf16, #tpu.memory_space<vmem>>, vector<1x1x128x64xbf16>,
    %64 = vector.extract_strided_slice %35 {offsets = [0, 128], sizes = [128, 64], strides = [1, 1]} : vector<128x256xbf16> to vector<128x64xbf16>
    %c0_39 = arith.constant 0 : index
    %c2 = arith.constant 2 : index
    %c0_40 = arith.constant 0 : index
    %c0_41 = arith.constant 0 : index
    %65 = vector.load %arg7[%c0_39, %c2, %c0_40, %c0_41] : memref<1x4x128x64xbf16, #tpu.memory_space<vmem>>, vector<1x1x128x64xbf16>
    %66 = vector.shape_cast %65 : vector<1x1x128x64xbf16> to vector<128x64xbf16>
    %67 = vector.shape_cast %64 : vector<128x64xbf16> to vector<1x1x128x64xbf16>
    tpu.vector_store %arg7[%c0_39, %c2, %c0_40, %c0_41], %67 {strides = array<i32>} : memref<1x4x128x64xbf16, #tpu.memory_space<vmem>>, vector<1x1x128x64xbf16>,
    %68 = vector.extract_strided_slice %37 {offsets = [0, 128], sizes = [128, 64], strides = [1, 1]} : vector<128x256xbf16> to vector<128x64xbf16>
    %c0_42 = arith.constant 0 : index
    %c2_43 = arith.constant 2 : index
    %c0_44 = arith.constant 0 : index
    %c0_45 = arith.constant 0 : index
    %69 = vector.load %arg8[%c0_42, %c2_43, %c0_44, %c0_45] : memref<1x4x128x64xbf16, #tpu.memory_space<vmem>>, vector<1x1x128x64xbf16>
    %70 = vector.shape_cast %69 : vector<1x1x128x64xbf16> to vector<128x64xbf16>
    %71 = vector.shape_cast %68 : vector<128x64xbf16> to vector<1x1x128x64xbf16>
    tpu.vector_store %arg8[%c0_42, %c2_43, %c0_44, %c0_45], %71 {strides = array<i32>} : memref<1x4x128x64xbf16, #tpu.memory_space<vmem>>, vector<1x1x128x64xbf16>,
    %72 = vector.extract_strided_slice %39 {offsets = [0, 128], sizes = [128, 64], strides = [1, 1]} : vector<128x256xbf16> to vector<128x64xbf16>
    %c0_46 = arith.constant 0 : index
    %c2_47 = arith.constant 2 : index
    %c0_48 = arith.constant 0 : index
    %c0_49 = arith.constant 0 : index
    %73 = vector.load %arg9[%c0_46, %c2_47, %c0_48, %c0_49] : memref<1x4x128x64xbf16, #tpu.memory_space<vmem>>, vector<1x1x128x64xbf16>
    %74 = vector.shape_cast %73 : vector<1x1x128x64xbf16> to vector<128x64xbf16>
    %75 = vector.shape_cast %72 : vector<128x64xbf16> to vector<1x1x128x64xbf16>
    tpu.vector_store %arg9[%c0_46, %c2_47, %c0_48, %c0_49], %75 {strides = array<i32>} : memref<1x4x128x64xbf16, #tpu.memory_space<vmem>>, vector<1x1x128x64xbf16>,
    %76 = vector.extract_strided_slice %35 {offsets = [0, 192], sizes = [128, 64], strides = [1, 1]} : vector<128x256xbf16> to vector<128x64xbf16>
    %c0_50 = arith.constant 0 : index
    %c3 = arith.constant 3 : index
    %c0_51 = arith.constant 0 : index
    %c0_52 = arith.constant 0 : index
    %77 = vector.load %arg7[%c0_50, %c3, %c0_51, %c0_52] : memref<1x4x128x64xbf16, #tpu.memory_space<vmem>>, vector<1x1x128x64xbf16>
    %78 = vector.shape_cast %77 : vector<1x1x128x64xbf16> to vector<128x64xbf16>
    %79 = vector.shape_cast %76 : vector<128x64xbf16> to vector<1x1x128x64xbf16>
    tpu.vector_store %arg7[%c0_50, %c3, %c0_51, %c0_52], %79 {strides = array<i32>} : memref<1x4x128x64xbf16, #tpu.memory_space<vmem>>, vector<1x1x128x64xbf16>,
    %80 = vector.extract_strided_slice %37 {offsets = [0, 192], sizes = [128, 64], strides = [1, 1]} : vector<128x256xbf16> to vector<128x64xbf16>
    %c0_53 = arith.constant 0 : index
    %c3_54 = arith.constant 3 : index
    %c0_55 = arith.constant 0 : index
    %c0_56 = arith.constant 0 : index
    %81 = vector.load %arg8[%c0_53, %c3_54, %c0_55, %c0_56] : memref<1x4x128x64xbf16, #tpu.memory_space<vmem>>, vector<1x1x128x64xbf16>
    %82 = vector.shape_cast %81 : vector<1x1x128x64xbf16> to vector<128x64xbf16>
    %83 = vector.shape_cast %80 : vector<128x64xbf16> to vector<1x1x128x64xbf16>
    tpu.vector_store %arg8[%c0_53, %c3_54, %c0_55, %c0_56], %83 {strides = array<i32>} : memref<1x4x128x64xbf16, #tpu.memory_space<vmem>>, vector<1x1x128x64xbf16>,
    %84 = vector.extract_strided_slice %39 {offsets = [0, 192], sizes = [128, 64], strides = [1, 1]} : vector<128x256xbf16> to vector<128x64xbf16>
    %c0_57 = arith.constant 0 : index
    %c3_58 = arith.constant 3 : index
    %c0_59 = arith.constant 0 : index
    %c0_60 = arith.constant 0 : index
    %85 = vector.load %arg9[%c0_57, %c3_58, %c0_59, %c0_60] : memref<1x4x128x64xbf16, #tpu.memory_space<vmem>>, vector<1x1x128x64xbf16>
    %86 = vector.shape_cast %85 : vector<1x1x128x64xbf16> to vector<128x64xbf16>
    %87 = vector.shape_cast %84 : vector<128x64xbf16> to vector<1x1x128x64xbf16>
    tpu.vector_store %arg9[%c0_57, %c3_58, %c0_59, %c0_60], %87 {strides = array<i32>} : memref<1x4x128x64xbf16, #tpu.memory_space<vmem>>, vector<1x1x128x64xbf16>,
    return
  }
  func.func @transform_0(%arg0: i32, %arg1: i32) -> (i32, i32, i32) {
    %c0_i32 = arith.constant 0 : i32
    %c0_i32_0 = arith.constant 0 : i32
    return %arg0, %arg1, %c0_i32 : i32, i32, i32
  }
  func.func @transform_1(%arg0: i32, %arg1: i32) -> (i32, i32) {
    %c0_i32 = arith.constant 0 : i32
    %c0_i32_0 = arith.constant 0 : i32
    %c0_i32_1 = arith.constant 0 : i32
    return %c0_i32, %c0_i32_0 : i32, i32
  }
  func.func @transform_2(%arg0: i32, %arg1: i32) -> (i32, i32) {
    %c0_i32 = arith.constant 0 : i32
    %c0_i32_0 = arith.constant 0 : i32
    %c0_i32_1 = arith.constant 0 : i32
    return %c0_i32, %c0_i32_0 : i32, i32
  }
  func.func @transform_3(%arg0: i32, %arg1: i32) -> (i32, i32) {
    %c0_i32 = arith.constant 0 : i32
    %c0_i32_0 = arith.constant 0 : i32
    %c0_i32_1 = arith.constant 0 : i32
    return %c0_i32, %c0_i32_0 : i32, i32
  }
  func.func @transform_4(%arg0: i32, %arg1: i32) -> (i32, i32) {
    %c0_i32 = arith.constant 0 : i32
    %c0_i32_0 = arith.constant 0 : i32
    %c0_i32_1 = arith.constant 0 : i32
    return %c0_i32, %c0_i32_0 : i32, i32
  }
  func.func @transform_5(%arg0: i32, %arg1: i32) -> (i32, i32, i32, i32) {
    %c0_i32 = arith.constant 0 : i32
    %c0_i32_0 = arith.constant 0 : i32
    %c0_i32_1 = arith.constant 0 : i32
    return %arg0, %c0_i32, %arg1, %c0_i32_0 : i32, i32, i32, i32
  }
  func.func @transform_6(%arg0: i32, %arg1: i32) -> (i32, i32, i32, i32) {
    %c0_i32 = arith.constant 0 : i32
    %c0_i32_0 = arith.constant 0 : i32
    %c0_i32_1 = arith.constant 0 : i32
    return %arg0, %c0_i32, %arg1, %c0_i32_0 : i32, i32, i32, i32
  }
  func.func @transform_7(%arg0: i32, %arg1: i32) -> (i32, i32, i32, i32) {
    %c0_i32 = arith.constant 0 : i32
    %c0_i32_0 = arith.constant 0 : i32
    %c0_i32_1 = arith.constant 0 : i32
    return %arg0, %c0_i32, %arg1, %c0_i32_0 : i32, i32, i32, i32
  }
}

</mosaic_0001>

<llo_original>
// kernel: tpu_custom_call.1
$region0: #{tpu_custom_call.1}
  #allocation0 [shape = 'u32[]', space=smem, size = 0x4, offset = 0x4, fixed_abs, tag = 'smem constant byte address 0x4 - core index']
  #allocation1 [shape = 'u32[144,128]{1,0:T(1,128)}', space=vmem, size = 0x12000, scoped, tag = 'internal scratch']
  #allocation15 [shape = 's32[]', space=sflag, size = 0x4, offset = 0, fixed_abs, tag = 'sflag constant byte address 0x0 - dummy sync flag']
  #allocation17 [shape = 's32[]', space=sflag, size = 0x4, offset = 0, fixed_abs, tag = 'sflag constant byte address 0x0 - dummy sync flag']
  #allocation19 [shape = 's32[]', space=sflag, size = 0x4, offset = 0, fixed_abs, tag = 'sflag constant byte address 0x0 - dummy sync flag']
  %s0 = inlined_call_operand.hbm [shape: f32[2,256,256], index: 0, kind: input, shape index: {}]
  %s1 = inlined_call_operand.hbm [shape: f32[1,256], index: 1, kind: input, shape index: {}]
  %s2 = inlined_call_operand.hbm [shape: f32[1,256], index: 2, kind: input, shape index: {}]
  %s3 = inlined_call_operand.hbm [shape: bf16[256,768], index: 3, kind: input, shape index: {}]
  %s4 = inlined_call_operand.hbm [shape: f32[1,768], index: 4, kind: input, shape index: {}]
  %s5 = inlined_call_operand.hbm [shape: bf16[2,4,256,64], index: 5, kind: output, shape index: {0}]
  %s6 = inlined_call_operand.hbm [shape: bf16[2,4,256,64], index: 6, kind: output, shape index: {1}]
  %s7 = inlined_call_operand.hbm [shape: bf16[2,4,256,64], index: 7, kind: output, shape index: {2}]
  %8 = xla_tuple %s5, %s6, %s7
  %s9 = sld [smem:[#allocation0]]
  $region89: #{tpu_custom_call.1} parent=0
    _
  %s11 = ssub.s32 1, %s9
  %s12 = scalar_select 0, %s11, %s9
  $region1: #{tpu_custom_call.1} parent=0
    #allocation2 [shape = 'u8[262144]{0}', space=vmem, size = 0x40000, scoped, tag = 'input window, operand 0']
    #allocation3 [shape = 's32[2]{0}', space=sflag, size = 0x8, scoped, tag = 'scoped memory for tpu_custom_call.1']
    #allocation4 [shape = 's32[2]{0}', space=sflag, size = 0x8, scoped, tag = 'scoped memory for tpu_custom_call.1']
    #allocation5 [shape = 'u8[1024]{0}', space=vmem, size = 0x400, scoped, tag = 'input window, operand 1, single buffered']
    #allocation6 [shape = 's32[1]{0}', space=sflag, size = 0x4, scoped, tag = 'scoped memory for tpu_custom_call.1']
    #allocation7 [shape = 'u8[1024]{0}', space=vmem, size = 0x400, scoped, tag = 'input window, operand 2, single buffered']
    #allocation8 [shape = 'u8[393216]{0}', space=vmem, size = 0x60000, scoped, tag = 'input window, operand 3, single buffered']
    #allocation9 [shape = 's32[1]{0}', space=sflag, size = 0x4, scoped, tag = 'scoped memory for tpu_custom_call.1']
    #allocation10 [shape = 'u8[3072]{0}', space=vmem, size = 0xc00, scoped, tag = 'input window, operand 4, single buffered']
    #allocation11 [shape = 'u8[262144]{0}', space=vmem, size = 0x40000, scoped, tag = 'output window, operand 0']
    #allocation12 [shape = 'u8[262144]{0}', space=vmem, size = 0x40000, scoped, tag = 'output window, operand 1']
    #allocation13 [shape = 's32[2]{0}', space=sflag, size = 0x8, scoped, tag = 'scoped memory for tpu_custom_call.1']
    #allocation14 [shape = 'u8[262144]{0}', space=vmem, size = 0x40000, scoped, tag = 'output window, operand 2']
    %13 = vsyncpa [#allocation3], 0
    %s14 = scalar_lea.sflag [#allocation3], 1
    %15 = vsyncpa %s14, 0
    %16 = vsyncpa [#allocation6], 0
    %17 = vsyncpa [#allocation9], 0
    %18 = vsyncpa [#allocation4], 0
    %s19 = scalar_lea.sflag [#allocation4], 1
    %20 = vsyncpa %s19, 0
    %21 = vsyncpa [#allocation13], 0
    %s22 = scalar_lea.sflag [#allocation13], 1
    %23 = vsyncpa %s22, 0
    loop: start=0, step=1, limit=6
    $region2: #{tpu_custom_call.1} parent=1 // loop_pre_header
      _
    $region3: #{tpu_custom_call.1} parent=1 // loop_header
      %s25 = sphi 0, %s29
      %p26 = scmp.ge.s32.totalorder %s25, 6
      %s32 = sphi 0, %s44
      %s33 = sphi 0, %s40
      %s34 = sphi 0, %s32
      %s35 = sphi 0, %s33
      %s36 = sphi 0, %s34
      %s37 = sphi 0, %s35
      %s49 = sphi 0, %s51
      %s52 = sphi 0, %s49
      %s53 = sphi 0, %s52
      %s69 = sphi 0, %s53
      %s73 = sphi 0, %s73
      %s75 = sphi 0, %s73
      %s76 = sphi 0, %s75
      %s90 = sphi 0, %s76
      %s94 = sphi 0, %s94
      %s96 = sphi 0, %s94
      %s97 = sphi 0, %s96
      %s111 = sphi 0, %s97
      %s115 = sphi 0, %s115
      %s117 = sphi 0, %s115
      %s118 = sphi 0, %s117
      %s132 = sphi 0, %s118
      %s136 = sphi 0, %s136
      %s138 = sphi 0, %s136
      %s139 = sphi 0, %s138
      %s153 = sphi 0, %s139
      %s161 = sphi 0, %s163
      %s164 = sphi 0, %s161
      %s165 = sphi 0, %s164
      %s181 = sphi 0, %s165
      %s189 = sphi 0, %s191
      %s192 = sphi 0, %s189
      %s193 = sphi 0, %s192
      %s209 = sphi 0, %s193
      %s217 = sphi 0, %s219
      %s220 = sphi 0, %s217
      %s221 = sphi 0, %s220
      %s237 = sphi 0, %s221
    $region4: #{tpu_custom_call.1} parent=1 // loop_header_branch
      %28 = sbr.rel (%p26) target = $region8
    $region5: #{tpu_custom_call.1} parent=1 // loop_body
      %s30 = ssub.s32 %s25, 1
      %s31 = ssub.s32 %s25, 2
      %s38 = sadd.s32 1, %s33
      %p39 = scmp.ge.s32.totalorder %s38, 2
      %s40 = scalar_select %p39, 0, %s38
      %s41 = sadd.s32 1, %s32
      %s42 = scalar_select %p39, %s41, %s32
      %p43 = scmp.ge.s32.totalorder %s42, 2
      %s44 = scalar_select %p43, 0, %s42
      %s45 = ssub.s32 %s32, %s44
      %s46 = ssub.s32 %s33, %s40
      %s47 = sor.u32 %s45, %s46
      %p48 = scmp.eq.s32.totalorder %s47, 0
      %s50 = sadd.s32 %s49, 1
      %s51 = scalar_select %p48, %s49, %s50
      %p54 = pneg %p48
      %p55 = scmp.eq.s32.totalorder %s25, 3
      %p56 = por %p54, %p55
      %p57 = scmp.ne.s32.totalorder %s49, %s52
      %p58 = scmp.eq.s32.totalorder %s25, 0
      %p59 = por %p57, %p58
      %p60 = scmp.ne.s32.totalorder %s49, %s52
      %p61 = scmp.eq.s32.totalorder %s30, 3
      %p62 = por %p60, %p61
      %p63 = scmp.ne.s32.totalorder %s52, %s53
      %p64 = scmp.eq.s32.totalorder %s30, 0
      %p65 = por %p63, %p64
      %p66 = scmp.ne.s32.totalorder %s52, %s53
      %p67 = scmp.eq.s32.totalorder %s31, 3
      %p68 = por %p66, %p67
      %p70 = scmp.ne.s32.totalorder %s53, %s69
      %p71 = scmp.eq.s32.totalorder %s31, 0
      %p72 = por %p70, %p71
      %s74 = sadd.s32 %s73, 1
      %p77 = scmp.eq.s32.totalorder %s25, 3
      %p78 = scmp.ne.s32.totalorder %s73, %s75
      %p79 = scmp.eq.s32.totalorder %s25, 0
      %p80 = por %p78, %p79
      %p81 = scmp.ne.s32.totalorder %s73, %s75
      %p82 = scmp.eq.s32.totalorder %s30, 3
      %p83 = por %p81, %p82
      %p84 = scmp.ne.s32.totalorder %s75, %s76
      %p85 = scmp.eq.s32.totalorder %s30, 0
      %p86 = por %p84, %p85
      %p87 = scmp.ne.s32.totalorder %s75, %s76
      %p88 = scmp.eq.s32.totalorder %s31, 3
      %p89 = por %p87, %p88
      %p91 = scmp.ne.s32.totalorder %s76, %s90
      %p92 = scmp.eq.s32.totalorder %s31, 0
      %p93 = por %p91, %p92
      %s95 = sadd.s32 %s94, 1
      %p98 = scmp.eq.s32.totalorder %s25, 3
      %p99 = scmp.ne.s32.totalorder %s94, %s96
      %p100 = scmp.eq.s32.totalorder %s25, 0
      %p101 = por %p99, %p100
      %p102 = scmp.ne.s32.totalorder %s94, %s96
      %p103 = scmp.eq.s32.totalorder %s30, 3
      %p104 = por %p102, %p103
      %p105 = scmp.ne.s32.totalorder %s96, %s97
      %p106 = scmp.eq.s32.totalorder %s30, 0
      %p107 = por %p105, %p106
      %p108 = scmp.ne.s32.totalorder %s96, %s97
      %p109 = scmp.eq.s32.totalorder %s31, 3
      %p110 = por %p108, %p109
      %p112 = scmp.ne.s32.totalorder %s97, %s111
      %p113 = scmp.eq.s32.totalorder %s31, 0
      %p114 = por %p112, %p113
      %s116 = sadd.s32 %s115, 1
      %p119 = scmp.eq.s32.totalorder %s25, 3
      %p120 = scmp.ne.s32.totalorder %s115, %s117
      %p121 = scmp.eq.s32.totalorder %s25, 0
      %p122 = por %p120, %p121
      %p123 = scmp.ne.s32.totalorder %s115, %s117
      %p124 = scmp.eq.s32.totalorder %s30, 3
      %p125 = por %p123, %p124
      %p126 = scmp.ne.s32.totalorder %s117, %s118
      %p127 = scmp.eq.s32.totalorder %s30, 0
      %p128 = por %p126, %p127
      %p129 = scmp.ne.s32.totalorder %s117, %s118
      %p130 = scmp.eq.s32.totalorder %s31, 3
      %p131 = por %p129, %p130
      %p133 = scmp.ne.s32.totalorder %s118, %s132
      %p134 = scmp.eq.s32.totalorder %s31, 0
      %p135 = por %p133, %p134
      %s137 = sadd.s32 %s136, 1
      %p140 = scmp.eq.s32.totalorder %s25, 3
      %p141 = scmp.ne.s32.totalorder %s136, %s138
      %p142 = scmp.eq.s32.totalorder %s25, 0
      %p143 = por %p141, %p142
      %p144 = scmp.ne.s32.totalorder %s136, %s138
      %p145 = scmp.eq.s32.totalorder %s30, 3
      %p146 = por %p144, %p145
      %p147 = scmp.ne.s32.totalorder %s138, %s139
      %p148 = scmp.eq.s32.totalorder %s30, 0
      %p149 = por %p147, %p148
      %p150 = scmp.ne.s32.totalorder %s138, %s139
      %p151 = scmp.eq.s32.totalorder %s31, 3
      %p152 = por %p150, %p151
      %p154 = scmp.ne.s32.totalorder %s139, %s153
      %p155 = scmp.eq.s32.totalorder %s31, 0
      %p156 = por %p154, %p155
      %s157 = ssub.s32 %s32, %s44
      %s158 = ssub.s32 %s33, %s40
      %s159 = sor.u32 %s157, %s158
      %p160 = scmp.eq.s32.totalorder %s159, 0
      %s162 = sadd.s32 %s161, 1
      %s163 = scalar_select %p160, %s161, %s162
      %p166 = pneg %p160
      %p167 = scmp.eq.s32.totalorder %s25, 3
      %p168 = por %p166, %p167
      %p169 = scmp.ne.s32.totalorder %s161, %s164
      %p170 = scmp.eq.s32.totalorder %s25, 0
      %p171 = por %p169, %p170
      %p172 = scmp.ne.s32.totalorder %s161, %s164
      %p173 = scmp.eq.s32.totalorder %s30, 3
      %p174 = por %p172, %p173
      %p175 = scmp.ne.s32.totalorder %s164, %s165
      %p176 = scmp.eq.s32.totalorder %s30, 0
      %p177 = por %p175, %p176
      %p178 = scmp.ne.s32.totalorder %s164, %s165
      %p179 = scmp.eq.s32.totalorder %s31, 3
      %p180 = por %p178, %p179
      %p182 = scmp.ne.s32.totalorder %s165, %s181
      %p183 = scmp.eq.s32.totalorder %s31, 0
      %p184 = por %p182, %p183
      %s185 = ssub.s32 %s32, %s44
      %s186 = ssub.s32 %s33, %s40
      %s187 = sor.u32 %s185, %s186
      %p188 = scmp.eq.s32.totalorder %s187, 0
      %s190 = sadd.s32 %s189, 1
      %s191 = scalar_select %p188, %s189, %s190
      %p194 = pneg %p188
      %p195 = scmp.eq.s32.totalorder %s25, 3
      %p196 = por %p194, %p195
      %p197 = scmp.ne.s32.totalorder %s189, %s192
      %p198 = scmp.eq.s32.totalorder %s25, 0
      %p199 = por %p197, %p198
      %p200 = scmp.ne.s32.totalorder %s189, %s192
      %p201 = scmp.eq.s32.totalorder %s30, 3
      %p202 = por %p200, %p201
      %p203 = scmp.ne.s32.totalorder %s192, %s193
      %p204 = scmp.eq.s32.totalorder %s30, 0
      %p205 = por %p203, %p204
      %p206 = scmp.ne.s32.totalorder %s192, %s193
      %p207 = scmp.eq.s32.totalorder %s31, 3
      %p208 = por %p206, %p207
      %p210 = scmp.ne.s32.totalorder %s193, %s209
      %p211 = scmp.eq.s32.totalorder %s31, 0
      %p212 = por %p210, %p211
      %s213 = ssub.s32 %s32, %s44
      %s214 = ssub.s32 %s33, %s40
      %s215 = sor.u32 %s213, %s214
      %p216 = scmp.eq.s32.totalorder %s215, 0
      %s218 = sadd.s32 %s217, 1
      %s219 = scalar_select %p216, %s217, %s218
      %p222 = pneg %p216
      %p223 = scmp.eq.s32.totalorder %s25, 3
      %p224 = por %p222, %p223
      %p225 = scmp.ne.s32.totalorder %s217, %s220
      %p226 = scmp.eq.s32.totalorder %s25, 0
      %p227 = por %p225, %p226
      %p228 = scmp.ne.s32.totalorder %s217, %s220
      %p229 = scmp.eq.s32.totalorder %s30, 3
      %p230 = por %p228, %p229
      %p231 = scmp.ne.s32.totalorder %s220, %s221
      %p232 = scmp.eq.s32.totalorder %s30, 0
      %p233 = por %p231, %p232
      %p234 = scmp.ne.s32.totalorder %s220, %s221
      %p235 = scmp.eq.s32.totalorder %s31, 3
      %p236 = por %p234, %p235
      %p238 = scmp.ne.s32.totalorder %s221, %s237
      %p239 = scmp.eq.s32.totalorder %s31, 0
      %p240 = por %p238, %p239
      %p241 = scmp.le.s32.totalorder 1, %s25
      %p242 = scmp.lt.s32.totalorder %s25, 5
      %p243 = pnand %p241, %p242
      %p244 = pneg %p243
      // Predicated region
      $region9: #{tpu_custom_call.1} parent=5 // pred_check
        _
      $region10: #{tpu_custom_call.1} parent=5 // pred_check_branch
        %246 = sbr.rel (%p243) target = $region12
      $region11: #{tpu_custom_call.1} parent=5 // pred_region
        %s247 = ssub.s32 %s25, 1
        // Predicated region
        $region13: #{tpu_custom_call.1} parent=11 // pred_check
          %p248 = pneg %p86
        $region14: #{tpu_custom_call.1} parent=11 // pred_check_branch
          %250 = sbr.rel (%p248) target = $region16
        $region15: #{tpu_custom_call.1} parent=11 // pred_region
          %s252 = ssub.s32 32, 32
          %253 = vsyncadd [#allocation6], %s252
          %s255 = sshll.u32 [#allocation5], 4
          %s256 = int_to_ptr.vmem [resolvable:$true] %s255
          %258 = dma.hbm_to_vmem [thread:$0]  %s1, 32, %s256, [#allocation6]
        $region16: #{tpu_custom_call.1} parent=11 // pred_fallthru
          _
        // Predicated region
        $region17: #{tpu_custom_call.1} parent=11 // pred_check
          %p259 = pneg %p107
        $region18: #{tpu_custom_call.1} parent=11 // pred_check_branch
          %261 = sbr.rel (%p259) target = $region20
        $region19: #{tpu_custom_call.1} parent=11 // pred_region
          %s263 = ssub.s32 32, 32
          %264 = vsyncadd [#allocation6], %s263
          %s266 = sshll.u32 [#allocation7], 4
          %s267 = int_to_ptr.vmem [resolvable:$true] %s266
          %269 = dma.hbm_to_vmem [thread:$0]  %s2, 32, %s267, [#allocation6]
        $region20: #{tpu_custom_call.1} parent=11 // pred_fallthru
          _
        // Predicated region
        $region21: #{tpu_custom_call.1} parent=11 // pred_check
          %p270 = pneg %p128
        $region22: #{tpu_custom_call.1} parent=11 // pred_check_branch
          %272 = sbr.rel (%p270) target = $region24
        $region23: #{tpu_custom_call.1} parent=11 // pred_region
          %s274 = ssub.s32 12288, 12288
          %275 = vsyncadd [#allocation9], %s274
          %s276 = sshll.u32 [#allocation8], 4
          %s277 = int_to_ptr.vmem [resolvable:$true] %s276
          %282 = dma.hbm_to_vmem [thread:$0]  %s3, 12288, %s277, [#allocation9], 384, 384, 24
        $region24: #{tpu_custom_call.1} parent=11 // pred_fallthru
          _
        // Predicated region
        $region25: #{tpu_custom_call.1} parent=11 // pred_check
          %p283 = pneg %p149
        $region26: #{tpu_custom_call.1} parent=11 // pred_check_branch
          %285 = sbr.rel (%p283) target = $region28
        $region27: #{tpu_custom_call.1} parent=11 // pred_region
          %s287 = ssub.s32 96, 96
          %288 = vsyncadd [#allocation9], %s287
          %s290 = sshll.u32 [#allocation10], 4
          %s291 = int_to_ptr.vmem [resolvable:$true] %s290
          %293 = dma.hbm_to_vmem [thread:$0]  %s4, 96, %s291, [#allocation9]
        $region28: #{tpu_custom_call.1} parent=11 // pred_fallthru
          _
      $region12: #{tpu_custom_call.1} parent=5 // pred_fallthru
        _
      %p294 = scmp.lt.s32.totalorder %s25, 4
      // Predicated region
      $region29: #{tpu_custom_call.1} parent=5 // pred_check
        %p295 = pneg %p294
      $region30: #{tpu_custom_call.1} parent=5 // pred_check_branch
        %297 = sbr.rel (%p295) target = $region32
      $region31: #{tpu_custom_call.1} parent=5 // pred_region
        // Predicated region
        $region33: #{tpu_custom_call.1} parent=31 // pred_check
          %p298 = pneg %p59
        $region34: #{tpu_custom_call.1} parent=31 // pred_check_branch
          %300 = sbr.rel (%p298) target = $region36
        $region35: #{tpu_custom_call.1} parent=31 // pred_region
          %s301 = sand.u32 %s49, 1
          %s302 = scalar_lea.sflag [#allocation3], %s301
          %s303 = sand.u32 %s49, 1
          %s304 = smul.addr %s303, 256
          %s305 = scalar_lea.vmem [#allocation2], %s304
          %s306 = smul.u32 16, %s33
          %s308 = ssub.s32 4096, 4096
          %309 = vsyncadd %s302, %s308
          %s310 = smul.addr %s306, 2
          %s311 = smul.addr %s32, 64
          %s312 = sadd.s32 %s310, %s311
          %s313 = smul.addr %s312, 128
          %s314 = scalar_lea.hbm %s0, %s313
          %s315 = sshll.u32 %s305, 4
          %s316 = int_to_ptr.vmem [resolvable:$true] %s315
          %321 = dma.hbm_to_vmem [thread:$0]  %s314, 4096, %s316, %s302, 256, 256, 16
        $region36: #{tpu_custom_call.1} parent=31 // pred_fallthru
          _
      $region32: #{tpu_custom_call.1} parent=5 // pred_fallthru
        _
      %p322 = scmp.le.s32.totalorder 1, %s25
      %p323 = scmp.lt.s32.totalorder %s25, 5
      %p324 = pnand %p322, %p323
      %p325 = pneg %p324
      // Predicated region
      $region37: #{tpu_custom_call.1} parent=5 // pred_check
        _
      $region38: #{tpu_custom_call.1} parent=5 // pred_check_branch
        %327 = sbr.rel (%p324) target = $region40
      $region39: #{tpu_custom_call.1} parent=5 // pred_region
        %s328 = ssub.s32 %s25, 1
        %s329 = sand.u32 %s52, 1
        %s330 = scalar_lea.sflag [#allocation3], %s329
        %s331 = sand.u32 %s52, 1
        %s332 = smul.addr %s331, 256
        %s333 = scalar_lea.vmem [#allocation2], %s332
        // Predicated region
        $region41: #{tpu_custom_call.1} parent=39 // pred_check
          %p334 = pneg %p65
        $region42: #{tpu_custom_call.1} parent=39 // pred_check_branch
          %336 = sbr.rel (%p334) target = $region44
        $region43: #{tpu_custom_call.1} parent=39 // pred_region
          %337 = dma.done %s330, 4096
        $region44: #{tpu_custom_call.1} parent=39 // pred_fallthru
          _
        // Predicated region
        $region45: #{tpu_custom_call.1} parent=39 // pred_check
          %p338 = pneg %p86
        $region46: #{tpu_custom_call.1} parent=39 // pred_check_branch
          %340 = sbr.rel (%p338) target = $region48
        $region47: #{tpu_custom_call.1} parent=39 // pred_region
          %341 = dma.done [#allocation6], 32
        $region48: #{tpu_custom_call.1} parent=39 // pred_fallthru
          _
        // Predicated region
        $region49: #{tpu_custom_call.1} parent=39 // pred_check
          %p342 = pneg %p107
        $region50: #{tpu_custom_call.1} parent=39 // pred_check_branch
          %344 = sbr.rel (%p342) target = $region52
        $region51: #{tpu_custom_call.1} parent=39 // pred_region
          %345 = dma.done [#allocation6], 32
        $region52: #{tpu_custom_call.1} parent=39 // pred_fallthru
          _
        // Predicated region
        $region53: #{tpu_custom_call.1} parent=39 // pred_check
          %p346 = pneg %p128
        $region54: #{tpu_custom_call.1} parent=39 // pred_check_branch
          %348 = sbr.rel (%p346) target = $region56
        $region55: #{tpu_custom_call.1} parent=39 // pred_region
          %349 = dma.done [#allocation9], 12288
        $region56: #{tpu_custom_call.1} parent=39 // pred_fallthru
          _
        // Predicated region
        $region57: #{tpu_custom_call.1} parent=39 // pred_check
          %p350 = pneg %p149
        $region58: #{tpu_custom_call.1} parent=39 // pred_check_branch
          %352 = sbr.rel (%p350) target = $region60
        $region59: #{tpu_custom_call.1} parent=39 // pred_region
          %353 = dma.done [#allocation9], 96
        $region60: #{tpu_custom_call.1} parent=39 // pred_fallthru
          _
        %s354 = sand.u32 %s52, 1
        %s355 = scalar_lea.sflag [#allocation3], %s354
        %s356 = sand.u32 %s52, 1
        %s357 = smul.addr %s356, 256
        %s358 = scalar_lea.vmem [#allocation2], %s357
        %p359 = pneg %p65
        %p360 = pneg %p62
        %p361 = pneg %p86
        %p362 = pneg %p83
        %p363 = pneg %p107
        %p364 = pneg %p104
        %p365 = pneg %p128
        %p366 = pneg %p125
        %p367 = pneg %p149
        %p368 = pneg %p146
        %p369 = pneg %p177
        %p370 = pneg %p174
        %s371 = sand.u32 %s164, 1
        %s372 = scalar_lea.sflag [#allocation4], %s371
        %s373 = sand.u32 %s164, 1
        %s374 = smul.addr %s373, 256
        %s375 = scalar_lea.vmem [#allocation11], %s374
        %p376 = pneg %p205
        %p377 = pneg %p202
        %s378 = sand.u32 %s30, 1
        %s379 = scalar_lea.sflag [#allocation13], %s378
        %s380 = sand.u32 %s192, 1
        %s381 = smul.addr %s380, 256
        %s382 = scalar_lea.vmem [#allocation12], %s381
        %p383 = pneg %p233
        %p384 = pneg %p230
        %s385 = sand.u32 %s30, 1
        %s386 = scalar_lea.sflag [#allocation13], %s385
        %s387 = sand.u32 %s220, 1
        %s388 = smul.addr %s387, 256
        %s389 = scalar_lea.vmem [#allocation14], %s388
        %s390 = smul.u32 16, %s35
        %s391 = smul.u32 16, %s35
        %s392 = smul.u32 16, %s35
        %s393 = smul.u32 16, %s35
        %v394 = vld [vmem:[%s333] sm:$0xff]
        %v395 = vld [vmem:[%s333 + $0x8] sm:$0xff]
        %v396 = vld [vmem:[%s333 + $0x10] sm:$0xff]
        %v397 = vld [vmem:[%s333 + $0x18] sm:$0xff]
        %v398 = vld [vmem:[%s333 + $0x20] sm:$0xff]
        %v399 = vld [vmem:[%s333 + $0x28] sm:$0xff]
        %v400 = vld [vmem:[%s333 + $0x30] sm:$0xff]
        %v401 = vld [vmem:[%s333 + $0x38] sm:$0xff]
        %v402 = vld [vmem:[%s333 + $0x40] sm:$0xff]
        %v403 = vld [vmem:[%s333 + $0x48] sm:$0xff]
        %v404 = vld [vmem:[%s333 + $0x50] sm:$0xff]
        %v405 = vld [vmem:[%s333 + $0x58] sm:$0xff]
        %v406 = vld [vmem:[%s333 + $0x60] sm:$0xff]
        %v407 = vld [vmem:[%s333 + $0x68] sm:$0xff]
        %v408 = vld [vmem:[%s333 + $0x70] sm:$0xff]
        %v409 = vld [vmem:[%s333 + $0x78] sm:$0xff]
        %v410 = vld [vmem:[%s333 + $0x80] sm:$0xff]
        %v411 = vld [vmem:[%s333 + $0x88] sm:$0xff]
        %v412 = vld [vmem:[%s333 + $0x90] sm:$0xff]
        %v413 = vld [vmem:[%s333 + $0x98] sm:$0xff]
        %v414 = vld [vmem:[%s333 + $0xa0] sm:$0xff]
        %v415 = vld [vmem:[%s333 + $0xa8] sm:$0xff]
        %v416 = vld [vmem:[%s333 + $0xb0] sm:$0xff]
        %v417 = vld [vmem:[%s333 + $0xb8] sm:$0xff]
        %v418 = vld [vmem:[%s333 + $0xc0] sm:$0xff]
        %v419 = vld [vmem:[%s333 + $0xc8] sm:$0xff]
        %v420 = vld [vmem:[%s333 + $0xd0] sm:$0xff]
        %v421 = vld [vmem:[%s333 + $0xd8] sm:$0xff]
        %v422 = vld [vmem:[%s333 + $0xe0] sm:$0xff]
        %v423 = vld [vmem:[%s333 + $0xe8] sm:$0xff]
        %v424 = vld [vmem:[%s333 + $0xf0] sm:$0xff]
        %v425 = vld [vmem:[%s333 + $0xf8] sm:$0xff]
        %v426 = vadd.f32 %v394, %v395
        %427 = vadd.xlane.f32.xlu0 %v426
        %v428 = vpop.xlane.xlu0 %427
        %v429 = vadd.f32 %v396, %v397
        %430 = vadd.xlane.f32.xlu0 %v429
        %v431 = vpop.xlane.xlu0 %430
        %v432 = vadd.f32 %v398, %v399
        %433 = vadd.xlane.f32.xlu0 %v432
        %v434 = vpop.xlane.xlu0 %433
        %v435 = vadd.f32 %v400, %v401
        %436 = vadd.xlane.f32.xlu0 %v435
        %v437 = vpop.xlane.xlu0 %436
        %v438 = vadd.f32 %v402, %v403
        %439 = vadd.xlane.f32.xlu0 %v438
        %v440 = vpop.xlane.xlu0 %439
        %v441 = vadd.f32 %v404, %v405
        %442 = vadd.xlane.f32.xlu0 %v441
        %v443 = vpop.xlane.xlu0 %442
        %v444 = vadd.f32 %v406, %v407
        %445 = vadd.xlane.f32.xlu0 %v444
        %v446 = vpop.xlane.xlu0 %445
        %v447 = vadd.f32 %v408, %v409
        %448 = vadd.xlane.f32.xlu0 %v447
        %v449 = vpop.xlane.xlu0 %448
        %v450 = vadd.f32 %v410, %v411
        %451 = vadd.xlane.f32.xlu0 %v450
        %v452 = vpop.xlane.xlu0 %451
        %v453 = vadd.f32 %v412, %v413
        %454 = vadd.xlane.f32.xlu0 %v453
        %v455 = vpop.xlane.xlu0 %454
        %v456 = vadd.f32 %v414, %v415
        %457 = vadd.xlane.f32.xlu0 %v456
        %v458 = vpop.xlane.xlu0 %457
        %v459 = vadd.f32 %v416, %v417
        %460 = vadd.xlane.f32.xlu0 %v459
        %v461 = vpop.xlane.xlu0 %460
        %v462 = vadd.f32 %v418, %v419
        %463 = vadd.xlane.f32.xlu0 %v462
        %v464 = vpop.xlane.xlu0 %463
        %v465 = vadd.f32 %v420, %v421
        %466 = vadd.xlane.f32.xlu0 %v465
        %v467 = vpop.xlane.xlu0 %466
        %v468 = vadd.f32 %v422, %v423
        %469 = vadd.xlane.f32.xlu0 %v468
        %v470 = vpop.xlane.xlu0 %469
        %v471 = vadd.f32 %v424, %v425
        %472 = vadd.xlane.f32.xlu0 %v471
        %v473 = vpop.xlane.xlu0 %472
        %v474 = vrcp.pop 256.0
        %v475 = vmul.f32 %v428, %v474
        %v476 = vmul.f32 %v431, %v474
        %v477 = vmul.f32 %v434, %v474
        %v478 = vmul.f32 %v437, %v474
        %v479 = vmul.f32 %v440, %v474
        %v480 = vmul.f32 %v443, %v474
        %v481 = vmul.f32 %v446, %v474
        %v482 = vmul.f32 %v449, %v474
        %v483 = vmul.f32 %v452, %v474
        %v484 = vmul.f32 %v455, %v474
        %v485 = vmul.f32 %v458, %v474
        %v486 = vmul.f32 %v461, %v474
        %v487 = vmul.f32 %v464, %v474
        %v488 = vmul.f32 %v467, %v474
        %v489 = vmul.f32 %v470, %v474
        %v490 = vmul.f32 %v473, %v474
        %v491 = vsub.f32 %v394, %v475
        %v492 = vsub.f32 %v395, %v475
        %v493 = vsub.f32 %v396, %v476
        %v494 = vsub.f32 %v397, %v476
        %v495 = vsub.f32 %v398, %v477
        %v496 = vsub.f32 %v399, %v477
        %v497 = vsub.f32 %v400, %v478
        %v498 = vsub.f32 %v401, %v478
        %v499 = vsub.f32 %v402, %v479
        %v500 = vsub.f32 %v403, %v479
        %v501 = vsub.f32 %v404, %v480
        %v502 = vsub.f32 %v405, %v480
        %v503 = vsub.f32 %v406, %v481
        %v504 = vsub.f32 %v407, %v481
        %v505 = vsub.f32 %v408, %v482
        %v506 = vsub.f32 %v409, %v482
        %v507 = vsub.f32 %v410, %v483
        %v508 = vsub.f32 %v411, %v483
        %v509 = vsub.f32 %v412, %v484
        %v510 = vsub.f32 %v413, %v484
        %v511 = vsub.f32 %v414, %v485
        %v512 = vsub.f32 %v415, %v485
        %v513 = vsub.f32 %v416, %v486
        %v514 = vsub.f32 %v417, %v486
        %v515 = vsub.f32 %v418, %v487
        %v516 = vsub.f32 %v419, %v487
        %v517 = vsub.f32 %v420, %v488
        %v518 = vsub.f32 %v421, %v488
        %v519 = vsub.f32 %v422, %v489
        %v520 = vsub.f32 %v423, %v489
        %v521 = vsub.f32 %v424, %v490
        %v522 = vsub.f32 %v425, %v490
        %v523 = vmul.f32 %v491, %v491
        %v524 = vmul.f32 %v492, %v492
        %v525 = vmul.f32 %v493, %v493
        %v526 = vmul.f32 %v494, %v494
        %v527 = vmul.f32 %v495, %v495
        %v528 = vmul.f32 %v496, %v496
        %v529 = vmul.f32 %v497, %v497
        %v530 = vmul.f32 %v498, %v498
        %v531 = vmul.f32 %v499, %v499
        %v532 = vmul.f32 %v500, %v500
        %v533 = vmul.f32 %v501, %v501
        %v534 = vmul.f32 %v502, %v502
        %v535 = vmul.f32 %v503, %v503
        %v536 = vmul.f32 %v504, %v504
        %v537 = vmul.f32 %v505, %v505
        %v538 = vmul.f32 %v506, %v506
        %v539 = vmul.f32 %v507, %v507
        %v540 = vmul.f32 %v508, %v508
        %v541 = vmul.f32 %v509, %v509
        %v542 = vmul.f32 %v510, %v510
        %v543 = vmul.f32 %v511, %v511
        %v544 = vmul.f32 %v512, %v512
        %v545 = vmul.f32 %v513, %v513
        %v546 = vmul.f32 %v514, %v514
        %v547 = vmul.f32 %v515, %v515
        %v548 = vmul.f32 %v516, %v516
        %v549 = vmul.f32 %v517, %v517
        %v550 = vmul.f32 %v518, %v518
        %v551 = vmul.f32 %v519, %v519
        %v552 = vmul.f32 %v520, %v520
        %v553 = vmul.f32 %v521, %v521
        %v554 = vmul.f32 %v522, %v522
        %v555 = vadd.f32 %v523, %v524
        %556 = vadd.xlane.f32.xlu0 %v555
        %v557 = vpop.xlane.xlu0 %556
        %v558 = vadd.f32 %v525, %v526
        %559 = vadd.xlane.f32.xlu0 %v558
        %v560 = vpop.xlane.xlu0 %559
        %v561 = vadd.f32 %v527, %v528
        %562 = vadd.xlane.f32.xlu0 %v561
        %v563 = vpop.xlane.xlu0 %562
        %v564 = vadd.f32 %v529, %v530
        %565 = vadd.xlane.f32.xlu0 %v564
        %v566 = vpop.xlane.xlu0 %565
        %v567 = vadd.f32 %v531, %v532
        %568 = vadd.xlane.f32.xlu0 %v567
        %v569 = vpop.xlane.xlu0 %568
        %v570 = vadd.f32 %v533, %v534
        %571 = vadd.xlane.f32.xlu0 %v570
        %v572 = vpop.xlane.xlu0 %571
        %v573 = vadd.f32 %v535, %v536
        %574 = vadd.xlane.f32.xlu0 %v573
        %v575 = vpop.xlane.xlu0 %574
        %v576 = vadd.f32 %v537, %v538
        %577 = vadd.xlane.f32.xlu0 %v576
        %v578 = vpop.xlane.xlu0 %577
        %v579 = vadd.f32 %v539, %v540
        %580 = vadd.xlane.f32.xlu0 %v579
        %v581 = vpop.xlane.xlu0 %580
        %v582 = vadd.f32 %v541, %v542
        %583 = vadd.xlane.f32.xlu0 %v582
        %v584 = vpop.xlane.xlu0 %583
        %v585 = vadd.f32 %v543, %v544
        %586 = vadd.xlane.f32.xlu0 %v585
        %v587 = vpop.xlane.xlu0 %586
        %v588 = vadd.f32 %v545, %v546
        %589 = vadd.xlane.f32.xlu0 %v588
        %v590 = vpop.xlane.xlu0 %589
        %v591 = vadd.f32 %v547, %v548
        %592 = vadd.xlane.f32.xlu0 %v591
        %v593 = vpop.xlane.xlu0 %592
        %v594 = vadd.f32 %v549, %v550
        %595 = vadd.xlane.f32.xlu0 %v594
        %v596 = vpop.xlane.xlu0 %595
        %v597 = vadd.f32 %v551, %v552
        %598 = vadd.xlane.f32.xlu0 %v597
        %v599 = vpop.xlane.xlu0 %598
        %v600 = vadd.f32 %v553, %v554
        %601 = vadd.xlane.f32.xlu0 %v600
        %v602 = vpop.xlane.xlu0 %601
        %v603 = vmul.f32 %v557, %v474
        %v604 = vmul.f32 %v560, %v474
        %v605 = vmul.f32 %v563, %v474
        %v606 = vmul.f32 %v566, %v474
        %v607 = vmul.f32 %v569, %v474
        %v608 = vmul.f32 %v572, %v474
        %v609 = vmul.f32 %v575, %v474
        %v610 = vmul.f32 %v578, %v474
        %v611 = vmul.f32 %v581, %v474
        %v612 = vmul.f32 %v584, %v474
        %v613 = vmul.f32 %v587, %v474
        %v614 = vmul.f32 %v590, %v474
        %v615 = vmul.f32 %v593, %v474
        %v616 = vmul.f32 %v596, %v474
        %v617 = vmul.f32 %v599, %v474
        %v618 = vmul.f32 %v602, %v474
        %v619 = vadd.f32 %v603, 1e-05
        %v620 = vadd.f32 %v604, 1e-05
        %v621 = vadd.f32 %v605, 1e-05
        %v622 = vadd.f32 %v606, 1e-05
        %v623 = vadd.f32 %v607, 1e-05
        %v624 = vadd.f32 %v608, 1e-05
        %v625 = vadd.f32 %v609, 1e-05
        %v626 = vadd.f32 %v610, 1e-05
        %v627 = vadd.f32 %v611, 1e-05
        %v628 = vadd.f32 %v612, 1e-05
        %v629 = vadd.f32 %v613, 1e-05
        %v630 = vadd.f32 %v614, 1e-05
        %v631 = vadd.f32 %v615, 1e-05
        %v632 = vadd.f32 %v616, 1e-05
        %v633 = vadd.f32 %v617, 1e-05
        %v634 = vadd.f32 %v618, 1e-05
        %v635 = vrsqrt.pop %v619
        %v636 = vrsqrt.pop %v620
        %v637 = vrsqrt.pop %v621
        %v638 = vrsqrt.pop %v622
        %v639 = vrsqrt.pop %v623
        %v640 = vrsqrt.pop %v624
        %v641 = vrsqrt.pop %v625
        %v642 = vrsqrt.pop %v626
        %v643 = vrsqrt.pop %v627
        %v644 = vrsqrt.pop %v628
        %v645 = vrsqrt.pop %v629
        %v646 = vrsqrt.pop %v630
        %v647 = vrsqrt.pop %v631
        %v648 = vrsqrt.pop %v632
        %v649 = vrsqrt.pop %v633
        %v650 = vrsqrt.pop %v634
        %v651 = vmul.f32 %v491, %v635
        %v652 = vmul.f32 %v492, %v635
        %v653 = vmul.f32 %v493, %v636
        %v654 = vmul.f32 %v494, %v636
        %v655 = vmul.f32 %v495, %v637
        %v656 = vmul.f32 %v496, %v637
        %v657 = vmul.f32 %v497, %v638
        %v658 = vmul.f32 %v498, %v638
        %v659 = vmul.f32 %v499, %v639
        %v660 = vmul.f32 %v500, %v639
        %v661 = vmul.f32 %v501, %v640
        %v662 = vmul.f32 %v502, %v640
        %v663 = vmul.f32 %v503, %v641
        %v664 = vmul.f32 %v504, %v641
        %v665 = vmul.f32 %v505, %v642
        %v666 = vmul.f32 %v506, %v642
        %v667 = vmul.f32 %v507, %v643
        %v668 = vmul.f32 %v508, %v643
        %v669 = vmul.f32 %v509, %v644
        %v670 = vmul.f32 %v510, %v644
        %v671 = vmul.f32 %v511, %v645
        %v672 = vmul.f32 %v512, %v645
        %v673 = vmul.f32 %v513, %v646
        %v674 = vmul.f32 %v514, %v646
        %v675 = vmul.f32 %v515, %v647
        %v676 = vmul.f32 %v516, %v647
        %v677 = vmul.f32 %v517, %v648
        %v678 = vmul.f32 %v518, %v648
        %v679 = vmul.f32 %v519, %v649
        %v680 = vmul.f32 %v520, %v649
        %v681 = vmul.f32 %v521, %v650
        %v682 = vmul.f32 %v522, %v650
        %v683 = vld [vmem:[#allocation5] sm:$0x3]
        %v685 = vlaneseq
        %v686 = vshrl.u32 %v685, 7
        %v687 = vsub.s32 0, %v686
        %v688 = vrot.slane %v683, %v687
        %v689 = vlaneseq
        %v690 = vshrl.u32 %v689, 7
        %v691 = vsub.s32 1, %v690
        %v692 = vrot.slane %v683, %v691
        %v695 = vmul.f32 %v651, %v688
        %v696 = vmul.f32 %v652, %v692
        %v697 = vmul.f32 %v653, %v688
        %v698 = vmul.f32 %v654, %v692
        %v699 = vmul.f32 %v655, %v688
        %v700 = vmul.f32 %v656, %v692
        %v701 = vmul.f32 %v657, %v688
        %v702 = vmul.f32 %v658, %v692
        %v703 = vmul.f32 %v659, %v688
        %v704 = vmul.f32 %v660, %v692
        %v705 = vmul.f32 %v661, %v688
        %v706 = vmul.f32 %v662, %v692
        %v707 = vmul.f32 %v663, %v688
        %v708 = vmul.f32 %v664, %v692
        %v709 = vmul.f32 %v665, %v688
        %v710 = vmul.f32 %v666, %v692
        %v711 = vmul.f32 %v667, %v688
        %v712 = vmul.f32 %v668, %v692
        %v713 = vmul.f32 %v669, %v688
        %v714 = vmul.f32 %v670, %v692
        %v715 = vmul.f32 %v671, %v688
        %v716 = vmul.f32 %v672, %v692
        %v717 = vmul.f32 %v673, %v688
        %v718 = vmul.f32 %v674, %v692
        %v719 = vmul.f32 %v675, %v688
        %v720 = vmul.f32 %v676, %v692
        %v721 = vmul.f32 %v677, %v688
        %v722 = vmul.f32 %v678, %v692
        %v723 = vmul.f32 %v679, %v688
        %v724 = vmul.f32 %v680, %v692
        %v725 = vmul.f32 %v681, %v688
        %v726 = vmul.f32 %v682, %v692
        %v727 = vld [vmem:[#allocation7] sm:$0x3]
        %v729 = vlaneseq
        %v730 = vshrl.u32 %v729, 7
        %v731 = vsub.s32 0, %v730
        %v732 = vrot.slane %v727, %v731
        %v733 = vlaneseq
        %v734 = vshrl.u32 %v733, 7
        %v735 = vsub.s32 1, %v734
        %v736 = vrot.slane %v727, %v735
        %v739 = vadd.f32 %v695, %v732
        %v740 = vadd.f32 %v696, %v736
        %v741 = vadd.f32 %v697, %v732
        %v742 = vadd.f32 %v698, %v736
        %v743 = vadd.f32 %v699, %v732
        %v744 = vadd.f32 %v700, %v736
        %v745 = vadd.f32 %v701, %v732
        %v746 = vadd.f32 %v702, %v736
        %v747 = vadd.f32 %v703, %v732
        %v748 = vadd.f32 %v704, %v736
        %v749 = vadd.f32 %v705, %v732
        %v750 = vadd.f32 %v706, %v736
        %v751 = vadd.f32 %v707, %v732
        %v752 = vadd.f32 %v708, %v736
        %v753 = vadd.f32 %v709, %v732
        %v754 = vadd.f32 %v710, %v736
        %v755 = vadd.f32 %v711, %v732
        %v756 = vadd.f32 %v712, %v736
        %v757 = vadd.f32 %v713, %v732
        %v758 = vadd.f32 %v714, %v736
        %v759 = vadd.f32 %v715, %v732
        %v760 = vadd.f32 %v716, %v736
        %v761 = vadd.f32 %v717, %v732
        %v762 = vadd.f32 %v718, %v736
        %v763 = vadd.f32 %v719, %v732
        %v764 = vadd.f32 %v720, %v736
        %v765 = vadd.f32 %v721, %v732
        %v766 = vadd.f32 %v722, %v736
        %v767 = vadd.f32 %v723, %v732
        %v768 = vadd.f32 %v724, %v736
        %v769 = vadd.f32 %v725, %v732
        %v770 = vadd.f32 %v726, %v736
        %v771 = vpack.c.bf16 %v741, %v739
        %v772 = vpack.c.bf16 %v742, %v740
        %v773 = vpack.c.bf16 %v745, %v743
        %v774 = vpack.c.bf16 %v746, %v744
        %v775 = vpack.c.bf16 %v749, %v747
        %v776 = vpack.c.bf16 %v750, %v748
        %v777 = vpack.c.bf16 %v753, %v751
        %v778 = vpack.c.bf16 %v754, %v752
        %v779 = vpack.c.bf16 %v757, %v755
        %v780 = vpack.c.bf16 %v758, %v756
        %v781 = vpack.c.bf16 %v761, %v759
        %v782 = vpack.c.bf16 %v762, %v760
        %v783 = vpack.c.bf16 %v765, %v763
        %v784 = vpack.c.bf16 %v766, %v764
        %v785 = vpack.c.bf16 %v769, %v767
        %v786 = vpack.c.bf16 %v770, %v768
        %v787 = vld [vmem:[#allocation8] sm:$0xff]
        %v788 = vld [vmem:[#allocation8 + $0x8] sm:$0xff]
        %v789 = vld [vmem:[#allocation8 + $0x10] sm:$0xff]
        %v790 = vld [vmem:[#allocation8 + $0x18] sm:$0xff]
        %v791 = vld [vmem:[#allocation8 + $0x20] sm:$0xff]
        %v792 = vld [vmem:[#allocation8 + $0x28] sm:$0xff]
        %v793 = vld [vmem:[#allocation8 + $0x30] sm:$0xff]
        %v794 = vld [vmem:[#allocation8 + $0x38] sm:$0xff]
        %v795 = vld [vmem:[#allocation8 + $0x40] sm:$0xff]
        %v796 = vld [vmem:[#allocation8 + $0x48] sm:$0xff]
        %v797 = vld [vmem:[#allocation8 + $0x50] sm:$0xff]
        %v798 = vld [vmem:[#allocation8 + $0x58] sm:$0xff]
        %v799 = vld [vmem:[#allocation8 + $0x60] sm:$0xff]
        %v800 = vld [vmem:[#allocation8 + $0x68] sm:$0xff]
        %v801 = vld [vmem:[#allocation8 + $0x70] sm:$0xff]
        %v802 = vld [vmem:[#allocation8 + $0x78] sm:$0xff]
        %v803 = vld [vmem:[#allocation8 + $0x80] sm:$0xff]
        %v804 = vld [vmem:[#allocation8 + $0x88] sm:$0xff]
        %v805 = vld [vmem:[#allocation8 + $0x90] sm:$0xff]
        %v806 = vld [vmem:[#allocation8 + $0x98] sm:$0xff]
        %v807 = vld [vmem:[#allocation8 + $0xa0] sm:$0xff]
        %v808 = vld [vmem:[#allocation8 + $0xa8] sm:$0xff]
        %v809 = vld [vmem:[#allocation8 + $0xb0] sm:$0xff]
        %v810 = vld [vmem:[#allocation8 + $0xb8] sm:$0xff]
        %v811 = vld [vmem:[#allocation8 + $0xc0] sm:$0xff]
        %v812 = vld [vmem:[#allocation8 + $0xc8] sm:$0xff]
        %v813 = vld [vmem:[#allocation8 + $0xd0] sm:$0xff]
        %v814 = vld [vmem:[#allocation8 + $0xd8] sm:$0xff]
        %v815 = vld [vmem:[#allocation8 + $0xe0] sm:$0xff]
        %v816 = vld [vmem:[#allocation8 + $0xe8] sm:$0xff]
        %v817 = vld [vmem:[#allocation8 + $0xf0] sm:$0xff]
        %v818 = vld [vmem:[#allocation8 + $0xf8] sm:$0xff]
        %v819 = vld [vmem:[#allocation8 + $0x100] sm:$0xff]
        %v820 = vld [vmem:[#allocation8 + $0x108] sm:$0xff]
        %v821 = vld [vmem:[#allocation8 + $0x110] sm:$0xff]
        %v822 = vld [vmem:[#allocation8 + $0x118] sm:$0xff]
        %v823 = vld [vmem:[#allocation8 + $0x120] sm:$0xff]
        %v824 = vld [vmem:[#allocation8 + $0x128] sm:$0xff]
        %v825 = vld [vmem:[#allocation8 + $0x130] sm:$0xff]
        %v826 = vld [vmem:[#allocation8 + $0x138] sm:$0xff]
        %v827 = vld [vmem:[#allocation8 + $0x140] sm:$0xff]
        %v828 = vld [vmem:[#allocation8 + $0x148] sm:$0xff]
        %v829 = vld [vmem:[#allocation8 + $0x150] sm:$0xff]
        %v830 = vld [vmem:[#allocation8 + $0x158] sm:$0xff]
        %v831 = vld [vmem:[#allocation8 + $0x160] sm:$0xff]
        %v832 = vld [vmem:[#allocation8 + $0x168] sm:$0xff]
        %v833 = vld [vmem:[#allocation8 + $0x170] sm:$0xff]
        %v834 = vld [vmem:[#allocation8 + $0x178] sm:$0xff]
        %v835 = vld [vmem:[#allocation8 + $0x180] sm:$0xff]
        %v836 = vld [vmem:[#allocation8 + $0x188] sm:$0xff]
        %v837 = vld [vmem:[#allocation8 + $0x190] sm:$0xff]
        %v838 = vld [vmem:[#allocation8 + $0x198] sm:$0xff]
        %v839 = vld [vmem:[#allocation8 + $0x1a0] sm:$0xff]
        %v840 = vld [vmem:[#allocation8 + $0x1a8] sm:$0xff]
        %v841 = vld [vmem:[#allocation8 + $0x1b0] sm:$0xff]
        %v842 = vld [vmem:[#allocation8 + $0x1b8] sm:$0xff]
        %v843 = vld [vmem:[#allocation8 + $0x1c0] sm:$0xff]
        %v844 = vld [vmem:[#allocation8 + $0x1c8] sm:$0xff]
        %v845 = vld [vmem:[#allocation8 + $0x1d0] sm:$0xff]
        %v846 = vld [vmem:[#allocation8 + $0x1d8] sm:$0xff]
        %v847 = vld [vmem:[#allocation8 + $0x1e0] sm:$0xff]
        %v848 = vld [vmem:[#allocation8 + $0x1e8] sm:$0xff]
        %v849 = vld [vmem:[#allocation8 + $0x1f0] sm:$0xff]
        %v850 = vld [vmem:[#allocation8 + $0x1f8] sm:$0xff]
        %v851 = vld [vmem:[#allocation8 + $0x200] sm:$0xff]
        %v852 = vld [vmem:[#allocation8 + $0x208] sm:$0xff]
        %v853 = vld [vmem:[#allocation8 + $0x210] sm:$0xff]
        %v854 = vld [vmem:[#allocation8 + $0x218] sm:$0xff]
        %v855 = vld [vmem:[#allocation8 + $0x220] sm:$0xff]
        %v856 = vld [vmem:[#allocation8 + $0x228] sm:$0xff]
        %v857 = vld [vmem:[#allocation8 + $0x230] sm:$0xff]
        %v858 = vld [vmem:[#allocation8 + $0x238] sm:$0xff]
        %v859 = vld [vmem:[#allocation8 + $0x240] sm:$0xff]
        %v860 = vld [vmem:[#allocation8 + $0x248] sm:$0xff]
        %v861 = vld [vmem:[#allocation8 + $0x250] sm:$0xff]
        %v862 = vld [vmem:[#allocation8 + $0x258] sm:$0xff]
        %v863 = vld [vmem:[#allocation8 + $0x260] sm:$0xff]
        %v864 = vld [vmem:[#allocation8 + $0x268] sm:$0xff]
        %v865 = vld [vmem:[#allocation8 + $0x270] sm:$0xff]
        %v866 = vld [vmem:[#allocation8 + $0x278] sm:$0xff]
        %v867 = vld [vmem:[#allocation8 + $0x280] sm:$0xff]
        %v868 = vld [vmem:[#allocation8 + $0x288] sm:$0xff]
        %v869 = vld [vmem:[#allocation8 + $0x290] sm:$0xff]
        %v870 = vld [vmem:[#allocation8 + $0x298] sm:$0xff]
        %v871 = vld [vmem:[#allocation8 + $0x2a0] sm:$0xff]
        %v872 = vld [vmem:[#allocation8 + $0x2a8] sm:$0xff]
        %v873 = vld [vmem:[#allocation8 + $0x2b0] sm:$0xff]
        %v874 = vld [vmem:[#allocation8 + $0x2b8] sm:$0xff]
        %v875 = vld [vmem:[#allocation8 + $0x2c0] sm:$0xff]
        %v876 = vld [vmem:[#allocation8 + $0x2c8] sm:$0xff]
        %v877 = vld [vmem:[#allocation8 + $0x2d0] sm:$0xff]
        %v878 = vld [vmem:[#allocation8 + $0x2d8] sm:$0xff]
        %v879 = vld [vmem:[#allocation8 + $0x2e0] sm:$0xff]
        %v880 = vld [vmem:[#allocation8 + $0x2e8] sm:$0xff]
        %v881 = vld [vmem:[#allocation8 + $0x2f0] sm:$0xff]
        %v882 = vld [vmem:[#allocation8 + $0x2f8] sm:$0xff]
        %v883 = vld [vmem:[#allocation10] sm:$0x3f]
        %v885 = vlaneseq
        %v886 = vshrl.u32 %v885, 7
        %v887 = vsub.s32 0, %v886
        %v888 = vrot.slane %v883, %v887
        %v889 = vlaneseq
        %v890 = vshrl.u32 %v889, 7
        %v891 = vsub.s32 1, %v890
        %v892 = vrot.slane %v883, %v891
        %v893 = vlaneseq
        %v894 = vshrl.u32 %v893, 7
        %v895 = vsub.s32 2, %v894
        %v896 = vrot.slane %v883, %v895
        %v897 = vlaneseq
        %v898 = vshrl.u32 %v897, 7
        %v899 = vsub.s32 3, %v898
        %v900 = vrot.slane %v883, %v899
        %v901 = vlaneseq
        %v902 = vshrl.u32 %v901, 7
        %v903 = vsub.s32 4, %v902
        %v904 = vrot.slane %v883, %v903
        %v905 = vlaneseq
        %v906 = vshrl.u32 %v905, 7
        %v907 = vsub.s32 5, %v906
        %v908 = vrot.slane %v883, %v907
        %v1011 = vunpack.c.l.b16 %v787
        %v1012 = vunpack.c.h.b16 %v787
        %v1013 = vunpack.c.l.b16 %v788
        %v1014 = vunpack.c.h.b16 %v788
        %v1015 = vunpack.c.l.b16 %v789
        %v1016 = vunpack.c.h.b16 %v789
        %v1017 = vunpack.c.l.b16 %v790
        %v1018 = vunpack.c.h.b16 %v790
        %v1019 = vunpack.c.l.b16 %v791
        %v1020 = vunpack.c.h.b16 %v791
        %v1021 = vunpack.c.l.b16 %v792
        %v1022 = vunpack.c.h.b16 %v792
        %v1023 = vunpack.c.l.b16 %v793
        %v1024 = vunpack.c.h.b16 %v793
        %v1025 = vunpack.c.l.b16 %v794
        %v1026 = vunpack.c.h.b16 %v794
        %v1027 = vunpack.c.l.b16 %v795
        %v1028 = vunpack.c.h.b16 %v795
        %v1029 = vunpack.c.l.b16 %v796
        %v1030 = vunpack.c.h.b16 %v796
        %v1031 = vunpack.c.l.b16 %v797
        %v1032 = vunpack.c.h.b16 %v797
        %v1033 = vunpack.c.l.b16 %v798
        %v1034 = vunpack.c.h.b16 %v798
        %v1035 = vunpack.c.l.b16 %v799
        %v1036 = vunpack.c.h.b16 %v799
        %v1037 = vunpack.c.l.b16 %v800
        %v1038 = vunpack.c.h.b16 %v800
        %v1039 = vunpack.c.l.b16 %v801
        %v1040 = vunpack.c.h.b16 %v801
        %v1041 = vunpack.c.l.b16 %v802
        %v1042 = vunpack.c.h.b16 %v802
        %v1043 = vunpack.c.l.b16 %v803
        %v1044 = vunpack.c.h.b16 %v803
        %v1045 = vunpack.c.l.b16 %v804
        %v1046 = vunpack.c.h.b16 %v804
        %v1047 = vunpack.c.l.b16 %v805
        %v1048 = vunpack.c.h.b16 %v805
        %v1049 = vunpack.c.l.b16 %v806
        %v1050 = vunpack.c.h.b16 %v806
        %v1051 = vunpack.c.l.b16 %v807
        %v1052 = vunpack.c.h.b16 %v807
        %v1053 = vunpack.c.l.b16 %v808
        %v1054 = vunpack.c.h.b16 %v808
        %v1055 = vunpack.c.l.b16 %v809
        %v1056 = vunpack.c.h.b16 %v809
        %v1057 = vunpack.c.l.b16 %v810
        %v1058 = vunpack.c.h.b16 %v810
        %v1059 = vunpack.c.l.b16 %v811
        %v1060 = vunpack.c.h.b16 %v811
        %v1061 = vunpack.c.l.b16 %v812
        %v1062 = vunpack.c.h.b16 %v812
        %v1063 = vunpack.c.l.b16 %v813
        %v1064 = vunpack.c.h.b16 %v813
        %v1065 = vunpack.c.l.b16 %v814
        %v1066 = vunpack.c.h.b16 %v814
        %v1067 = vunpack.c.l.b16 %v815
        %v1068 = vunpack.c.h.b16 %v815
        %v1069 = vunpack.c.l.b16 %v816
        %v1070 = vunpack.c.h.b16 %v816
        %v1071 = vunpack.c.l.b16 %v817
        %v1072 = vunpack.c.h.b16 %v817
        %v1073 = vunpack.c.l.b16 %v818
        %v1074 = vunpack.c.h.b16 %v818
        %v1075 = vunpack.c.l.b16 %v819
        %v1076 = vunpack.c.h.b16 %v819
        %v1077 = vunpack.c.l.b16 %v820
        %v1078 = vunpack.c.h.b16 %v820
        %v1079 = vunpack.c.l.b16 %v821
        %v1080 = vunpack.c.h.b16 %v821
        %v1081 = vunpack.c.l.b16 %v822
        %v1082 = vunpack.c.h.b16 %v822
        %v1083 = vunpack.c.l.b16 %v823
        %v1084 = vunpack.c.h.b16 %v823
        %v1085 = vunpack.c.l.b16 %v824
        %v1086 = vunpack.c.h.b16 %v824
        %v1087 = vunpack.c.l.b16 %v825
        %v1088 = vunpack.c.h.b16 %v825
        %v1089 = vunpack.c.l.b16 %v826
        %v1090 = vunpack.c.h.b16 %v826
        %v1091 = vunpack.c.l.b16 %v827
        %v1092 = vunpack.c.h.b16 %v827
        %v1093 = vunpack.c.l.b16 %v828
        %v1094 = vunpack.c.h.b16 %v828
        %v1095 = vunpack.c.l.b16 %v829
        %v1096 = vunpack.c.h.b16 %v829
        %v1097 = vunpack.c.l.b16 %v830
        %v1098 = vunpack.c.h.b16 %v830
        %v1099 = vunpack.c.l.b16 %v831
        %v1100 = vunpack.c.h.b16 %v831
        %v1101 = vunpack.c.l.b16 %v832
        %v1102 = vunpack.c.h.b16 %v832
        %v1103 = vunpack.c.l.b16 %v833
        %v1104 = vunpack.c.h.b16 %v833
        %v1105 = vunpack.c.l.b16 %v834
        %v1106 = vunpack.c.h.b16 %v834
        %v1107 = vunpack.c.l.b16 %v835
        %v1108 = vunpack.c.h.b16 %v835
        %v1109 = vunpack.c.l.b16 %v836
        %v1110 = vunpack.c.h.b16 %v836
        %v1111 = vunpack.c.l.b16 %v837
        %v1112 = vunpack.c.h.b16 %v837
        %v1113 = vunpack.c.l.b16 %v838
        %v1114 = vunpack.c.h.b16 %v838
        %v1115 = vunpack.c.l.b16 %v839
        %v1116 = vunpack.c.h.b16 %v839
        %v1117 = vunpack.c.l.b16 %v840
        %v1118 = vunpack.c.h.b16 %v840
        %v1119 = vunpack.c.l.b16 %v841
        %v1120 = vunpack.c.h.b16 %v841
        %v1121 = vunpack.c.l.b16 %v842
        %v1122 = vunpack.c.h.b16 %v842
        %v1123 = vunpack.c.l.b16 %v843
        %v1124 = vunpack.c.h.b16 %v843
        %v1125 = vunpack.c.l.b16 %v844
        %v1126 = vunpack.c.h.b16 %v844
        %v1127 = vunpack.c.l.b16 %v845
        %v1128 = vunpack.c.h.b16 %v845
        %v1129 = vunpack.c.l.b16 %v846
        %v1130 = vunpack.c.h.b16 %v846
        %v1131 = vunpack.c.l.b16 %v847
        %v1132 = vunpack.c.h.b16 %v847
        %v1133 = vunpack.c.l.b16 %v848
        %v1134 = vunpack.c.h.b16 %v848
        %v1135 = vunpack.c.l.b16 %v849
        %v1136 = vunpack.c.h.b16 %v849
        %v1137 = vunpack.c.l.b16 %v850
        %v1138 = vunpack.c.h.b16 %v850
        %v1139 = vunpack.c.l.b16 %v851
        %v1140 = vunpack.c.h.b16 %v851
        %v1141 = vunpack.c.l.b16 %v852
        %v1142 = vunpack.c.h.b16 %v852
        %v1143 = vunpack.c.l.b16 %v853
        %v1144 = vunpack.c.h.b16 %v853
        %v1145 = vunpack.c.l.b16 %v854
        %v1146 = vunpack.c.h.b16 %v854
        %v1147 = vunpack.c.l.b16 %v855
        %v1148 = vunpack.c.h.b16 %v855
        %v1149 = vunpack.c.l.b16 %v856
        %v1150 = vunpack.c.h.b16 %v856
        %v1151 = vunpack.c.l.b16 %v857
        %v1152 = vunpack.c.h.b16 %v857
        %v1153 = vunpack.c.l.b16 %v858
        %v1154 = vunpack.c.h.b16 %v858
        %v1155 = vunpack.c.l.b16 %v859
        %v1156 = vunpack.c.h.b16 %v859
        %v1157 = vunpack.c.l.b16 %v860
        %v1158 = vunpack.c.h.b16 %v860
        %v1159 = vunpack.c.l.b16 %v861
        %v1160 = vunpack.c.h.b16 %v861
        %v1161 = vunpack.c.l.b16 %v862
        %v1162 = vunpack.c.h.b16 %v862
        %v1163 = vunpack.c.l.b16 %v863
        %v1164 = vunpack.c.h.b16 %v863
        %v1165 = vunpack.c.l.b16 %v864
        %v1166 = vunpack.c.h.b16 %v864
        %v1167 = vunpack.c.l.b16 %v865
        %v1168 = vunpack.c.h.b16 %v865
        %v1169 = vunpack.c.l.b16 %v866
        %v1170 = vunpack.c.h.b16 %v866
        %v1171 = vunpack.c.l.b16 %v867
        %v1172 = vunpack.c.h.b16 %v867
        %v1173 = vunpack.c.l.b16 %v868
        %v1174 = vunpack.c.h.b16 %v868
        %v1175 = vunpack.c.l.b16 %v869
        %v1176 = vunpack.c.h.b16 %v869
        %v1177 = vunpack.c.l.b16 %v870
        %v1178 = vunpack.c.h.b16 %v870
        %v1179 = vunpack.c.l.b16 %v871
        %v1180 = vunpack.c.h.b16 %v871
        %v1181 = vunpack.c.l.b16 %v872
        %v1182 = vunpack.c.h.b16 %v872
        %v1183 = vunpack.c.l.b16 %v873
        %v1184 = vunpack.c.h.b16 %v873
        %v1185 = vunpack.c.l.b16 %v874
        %v1186 = vunpack.c.h.b16 %v874
        %v1187 = vunpack.c.l.b16 %v875
        %v1188 = vunpack.c.h.b16 %v875
        %v1189 = vunpack.c.l.b16 %v876
        %v1190 = vunpack.c.h.b16 %v876
        %v1191 = vunpack.c.l.b16 %v877
        %v1192 = vunpack.c.h.b16 %v877
        %v1193 = vunpack.c.l.b16 %v878
        %v1194 = vunpack.c.h.b16 %v878
        %v1195 = vunpack.c.l.b16 %v879
        %v1196 = vunpack.c.h.b16 %v879
        %v1197 = vunpack.c.l.b16 %v880
        %v1198 = vunpack.c.h.b16 %v880
        %v1199 = vunpack.c.l.b16 %v881
        %v1200 = vunpack.c.h.b16 %v881
        %v1201 = vunpack.c.l.b16 %v882
        %v1202 = vunpack.c.h.b16 %v882
        %v1203 = vpack.c.b16 %v1017, %v1011
        %v1204 = vpack.c.b16 %v1018, %v1012
        %v1205 = vpack.c.b16 %v1019, %v1013
        %v1206 = vpack.c.b16 %v1020, %v1014
        %v1207 = vpack.c.b16 %v1021, %v1015
        %v1208 = vpack.c.b16 %v1022, %v1016
        %v1209 = vpack.c.b16 %v1029, %v1023
        %v1210 = vpack.c.b16 %v1030, %v1024
        %v1211 = vpack.c.b16 %v1031, %v1025
        %v1212 = vpack.c.b16 %v1032, %v1026
        %v1213 = vpack.c.b16 %v1033, %v1027
        %v1214 = vpack.c.b16 %v1034, %v1028
        %v1215 = vpack.c.b16 %v1041, %v1035
        %v1216 = vpack.c.b16 %v1042, %v1036
        %v1217 = vpack.c.b16 %v1043, %v1037
        %v1218 = vpack.c.b16 %v1044, %v1038
        %v1219 = vpack.c.b16 %v1045, %v1039
        %v1220 = vpack.c.b16 %v1046, %v1040
        %v1221 = vpack.c.b16 %v1053, %v1047
        %v1222 = vpack.c.b16 %v1054, %v1048
        %v1223 = vpack.c.b16 %v1055, %v1049
        %v1224 = vpack.c.b16 %v1056, %v1050
        %v1225 = vpack.c.b16 %v1057, %v1051
        %v1226 = vpack.c.b16 %v1058, %v1052
        %v1227 = vpack.c.b16 %v1065, %v1059
        %v1228 = vpack.c.b16 %v1066, %v1060
        %v1229 = vpack.c.b16 %v1067, %v1061
        %v1230 = vpack.c.b16 %v1068, %v1062
        %v1231 = vpack.c.b16 %v1069, %v1063
        %v1232 = vpack.c.b16 %v1070, %v1064
        %v1233 = vpack.c.b16 %v1077, %v1071
        %v1234 = vpack.c.b16 %v1078, %v1072
        %v1235 = vpack.c.b16 %v1079, %v1073
        %v1236 = vpack.c.b16 %v1080, %v1074
        %v1237 = vpack.c.b16 %v1081, %v1075
        %v1238 = vpack.c.b16 %v1082, %v1076
        %v1239 = vpack.c.b16 %v1089, %v1083
        %v1240 = vpack.c.b16 %v1090, %v1084
        %v1241 = vpack.c.b16 %v1091, %v1085
        %v1242 = vpack.c.b16 %v1092, %v1086
        %v1243 = vpack.c.b16 %v1093, %v1087
        %v1244 = vpack.c.b16 %v1094, %v1088
        %v1245 = vpack.c.b16 %v1101, %v1095
        %v1246 = vpack.c.b16 %v1102, %v1096
        %v1247 = vpack.c.b16 %v1103, %v1097
        %v1248 = vpack.c.b16 %v1104, %v1098
        %v1249 = vpack.c.b16 %v1105, %v1099
        %v1250 = vpack.c.b16 %v1106, %v1100
        %v1251 = vpack.c.b16 %v1113, %v1107
        %v1252 = vpack.c.b16 %v1114, %v1108
        %v1253 = vpack.c.b16 %v1115, %v1109
        %v1254 = vpack.c.b16 %v1116, %v1110
        %v1255 = vpack.c.b16 %v1117, %v1111
        %v1256 = vpack.c.b16 %v1118, %v1112
        %v1257 = vpack.c.b16 %v1125, %v1119
        %v1258 = vpack.c.b16 %v1126, %v1120
        %v1259 = vpack.c.b16 %v1127, %v1121
        %v1260 = vpack.c.b16 %v1128, %v1122
        %v1261 = vpack.c.b16 %v1129, %v1123
        %v1262 = vpack.c.b16 %v1130, %v1124
        %v1263 = vpack.c.b16 %v1137, %v1131
        %v1264 = vpack.c.b16 %v1138, %v1132
        %v1265 = vpack.c.b16 %v1139, %v1133
        %v1266 = vpack.c.b16 %v1140, %v1134
        %v1267 = vpack.c.b16 %v1141, %v1135
        %v1268 = vpack.c.b16 %v1142, %v1136
        %v1269 = vpack.c.b16 %v1149, %v1143
        %v1270 = vpack.c.b16 %v1150, %v1144
        %v1271 = vpack.c.b16 %v1151, %v1145
        %v1272 = vpack.c.b16 %v1152, %v1146
        %v1273 = vpack.c.b16 %v1153, %v1147
        %v1274 = vpack.c.b16 %v1154, %v1148
        %v1275 = vpack.c.b16 %v1161, %v1155
        %v1276 = vpack.c.b16 %v1162, %v1156
        %v1277 = vpack.c.b16 %v1163, %v1157
        %v1278 = vpack.c.b16 %v1164, %v1158
        %v1279 = vpack.c.b16 %v1165, %v1159
        %v1280 = vpack.c.b16 %v1166, %v1160
        %v1281 = vpack.c.b16 %v1173, %v1167
        %v1282 = vpack.c.b16 %v1174, %v1168
        %v1283 = vpack.c.b16 %v1175, %v1169
        %v1284 = vpack.c.b16 %v1176, %v1170
        %v1285 = vpack.c.b16 %v1177, %v1171
        %v1286 = vpack.c.b16 %v1178, %v1172
        %v1287 = vpack.c.b16 %v1185, %v1179
        %v1288 = vpack.c.b16 %v1186, %v1180
        %v1289 = vpack.c.b16 %v1187, %v1181
        %v1290 = vpack.c.b16 %v1188, %v1182
        %v1291 = vpack.c.b16 %v1189, %v1183
        %v1292 = vpack.c.b16 %v1190, %v1184
        %v1293 = vpack.c.b16 %v1197, %v1191
        %v1294 = vpack.c.b16 %v1198, %v1192
        %v1295 = vpack.c.b16 %v1199, %v1193
        %v1296 = vpack.c.b16 %v1200, %v1194
        %v1297 = vpack.c.b16 %v1201, %v1195
        %v1298 = vpack.c.b16 %v1202, %v1196
        %1395 = vmatprep.subr.bf16.mxu0 %v1204
        %1396 = vmatpush1.bf16.msra.mxu0 %v1203
        %1397 = vmatprep.subr.bf16.mxu0 %v1210
        %1398 = vmatpush1.bf16.msra.mxu0 %v1209
        %1399 = vmatprep.subr.bf16.mxu0 %v1216
        %1400 = vmatpush1.bf16.msra.mxu0 %v1215
        %1401 = vmatprep.subr.bf16.mxu0 %v1222
        %1402 = vmatpush1.bf16.msra.mxu0 %v1221
        %1403 = vmatprep.subr.bf16.mxu0 %v1228
        %1404 = vmatpush1.bf16.msra.mxu0 %v1227
        %1405 = vmatprep.subr.bf16.mxu0 %v1234
        %1406 = vmatpush1.bf16.msra.mxu0 %v1233
        %1407 = vmatprep.subr.bf16.mxu0 %v1240
        %1408 = vmatpush1.bf16.msra.mxu0 %v1239
        %1409 = vmatprep.subr.bf16.mxu0 %v1246
        %1410 = vmatpush1.bf16.msra.mxu0 %v1245
        %1411 = vmatprep.subr.bf16.mxu0 %v1252
        %1412 = vmatpush1.bf16.msra.mxu0 %v1251
        %1413 = vmatprep.subr.bf16.mxu0 %v1258
        %1414 = vmatpush1.bf16.msra.mxu0 %v1257
        %1415 = vmatprep.subr.bf16.mxu0 %v1264
        %1416 = vmatpush1.bf16.msra.mxu0 %v1263
        %1417 = vmatprep.subr.bf16.mxu0 %v1270
        %1418 = vmatpush1.bf16.msra.mxu0 %v1269
        %1419 = vmatprep.subr.bf16.mxu0 %v1276
        %1420 = vmatpush1.bf16.msra.mxu0 %v1275
        %1421 = vmatprep.subr.bf16.mxu0 %v1282
        %1422 = vmatpush1.bf16.msra.mxu0 %v1281
        %1423 = vmatprep.subr.bf16.mxu0 %v1288
        %1424 = vmatpush1.bf16.msra.mxu0 %v1287
        %1425 = vmatprep.subr.bf16.mxu0 %v1294
        %1426 = vmatpush1.bf16.msra.mxu0 %v1293
        %1427 = vmatprep.mubr.bf16.mxu0 %v772
        %1428 = vmatmul.mubr.bf16.gmra.mrb[0].mxu0 %v771
        %v1429 = vpop.f32.mrb[0].mxu0
        %v1430 = vadd.f32 %v888, %v1429
        %v1431 = vpop.f32.mrb[0].mxu0
        %v1432 = vadd.f32 %v892, %v1431
        %v1433 = vpop.f32.mrb[0].mxu0
        %v1434 = vadd.f32 %v888, %v1433
        %v1435 = vpop.f32.mrb[0].mxu0
        %v1436 = vadd.f32 %v892, %v1435
        %1437 = vmatprep.mubr.bf16.mxu0 %v774
        %1438 = vmatmul.mubr.bf16.gmra.mrb[0].mxu0 %v773
        %v1439 = vpop.f32.mrb[0].mxu0
        %v1440 = vadd.f32 %v888, %v1439
        %v1441 = vpop.f32.mrb[0].mxu0
        %v1442 = vadd.f32 %v892, %v1441
        %v1443 = vpop.f32.mrb[0].mxu0
        %v1444 = vadd.f32 %v888, %v1443
        %v1445 = vpop.f32.mrb[0].mxu0
        %v1446 = vadd.f32 %v892, %v1445
        %1447 = vmatprep.mubr.bf16.mxu0 %v776
        %1448 = vmatmul.mubr.bf16.gmra.mrb[0].mxu0 %v775
        %v1449 = vpop.f32.mrb[0].mxu0
        %v1450 = vadd.f32 %v888, %v1449
        %v1451 = vpop.f32.mrb[0].mxu0
        %v1452 = vadd.f32 %v892, %v1451
        %v1453 = vpop.f32.mrb[0].mxu0
        %v1454 = vadd.f32 %v888, %v1453
        %v1455 = vpop.f32.mrb[0].mxu0
        %v1456 = vadd.f32 %v892, %v1455
        %1457 = vmatprep.mubr.bf16.mxu0 %v778
        %1458 = vmatmul.mubr.bf16.gmra.mrb[0].mxu0 %v777
        %v1459 = vpop.f32.mrb[0].mxu0
        %v1460 = vadd.f32 %v888, %v1459
        %v1461 = vpop.f32.mrb[0].mxu0
        %v1462 = vadd.f32 %v892, %v1461
        %v1463 = vpop.f32.mrb[0].mxu0
        %v1464 = vadd.f32 %v888, %v1463
        %v1465 = vpop.f32.mrb[0].mxu0
        %v1466 = vadd.f32 %v892, %v1465
        %1467 = vmatprep.mubr.bf16.mxu0 %v780
        %1468 = vmatmul.mubr.bf16.gmra.mrb[0].mxu0 %v779
        %v1469 = vpop.f32.mrb[0].mxu0
        %v1470 = vadd.f32 %v888, %v1469
        %v1471 = vpop.f32.mrb[0].mxu0
        %v1472 = vadd.f32 %v892, %v1471
        %v1473 = vpop.f32.mrb[0].mxu0
        %v1474 = vadd.f32 %v888, %v1473
        %v1475 = vpop.f32.mrb[0].mxu0
        %v1476 = vadd.f32 %v892, %v1475
        %1477 = vmatprep.mubr.bf16.mxu0 %v782
        %1478 = vmatmul.mubr.bf16.gmra.mrb[0].mxu0 %v781
        %v1479 = vpop.f32.mrb[0].mxu0
        %v1480 = vadd.f32 %v888, %v1479
        %v1481 = vpop.f32.mrb[0].mxu0
        %v1482 = vadd.f32 %v892, %v1481
        %v1483 = vpop.f32.mrb[0].mxu0
        %v1484 = vadd.f32 %v888, %v1483
        %v1485 = vpop.f32.mrb[0].mxu0
        %v1486 = vadd.f32 %v892, %v1485
        %1487 = vmatprep.mubr.bf16.mxu0 %v784
        %1488 = vmatmul.mubr.bf16.gmra.mrb[0].mxu0 %v783
        %v1489 = vpop.f32.mrb[0].mxu0
        %v1490 = vadd.f32 %v888, %v1489
        %v1491 = vpop.f32.mrb[0].mxu0
        %v1492 = vadd.f32 %v892, %v1491
        %v1493 = vpop.f32.mrb[0].mxu0
        %v1494 = vadd.f32 %v888, %v1493
        %v1495 = vpop.f32.mrb[0].mxu0
        %v1496 = vadd.f32 %v892, %v1495
        %1497 = vmatprep.mubr.bf16.mxu0 %v786
        %1498 = vmatmul.mubr.bf16.gmra.mrb[0].mxu0 %v785
        %v1499 = vpop.f32.mrb[0].mxu0
        %v1500 = vadd.f32 %v888, %v1499
        %v1501 = vpop.f32.mrb[0].mxu0
        %v1502 = vadd.f32 %v892, %v1501
        %v1503 = vpop.f32.mrb[0].mxu0
        %v1504 = vadd.f32 %v888, %v1503
        %v1505 = vpop.f32.mrb[0].mxu0
        %v1506 = vadd.f32 %v892, %v1505
        %1507 = vdwg.mxu0
        %1508 = vmatprep.subr.bf16.mxu0 %v1206
        %1509 = vmatpush1.bf16.msra.mxu0 %v1205
        %1510 = vmatprep.subr.bf16.mxu0 %v1212
        %1511 = vmatpush1.bf16.msra.mxu0 %v1211
        %1512 = vmatprep.subr.bf16.mxu0 %v1218
        %1513 = vmatpush1.bf16.msra.mxu0 %v1217
        %1514 = vmatprep.subr.bf16.mxu0 %v1224
        %1515 = vmatpush1.bf16.msra.mxu0 %v1223
        %1516 = vmatprep.subr.bf16.mxu0 %v1230
        %1517 = vmatpush1.bf16.msra.mxu0 %v1229
        %1518 = vmatprep.subr.bf16.mxu0 %v1236
        %1519 = vmatpush1.bf16.msra.mxu0 %v1235
        %1520 = vmatprep.subr.bf16.mxu0 %v1242
        %1521 = vmatpush1.bf16.msra.mxu0 %v1241
        %1522 = vmatprep.subr.bf16.mxu0 %v1248
        %1523 = vmatpush1.bf16.msra.mxu0 %v1247
        %1524 = vmatprep.subr.bf16.mxu0 %v1254
        %1525 = vmatpush1.bf16.msra.mxu0 %v1253
        %1526 = vmatprep.subr.bf16.mxu0 %v1260
        %1527 = vmatpush1.bf16.msra.mxu0 %v1259
        %1528 = vmatprep.subr.bf16.mxu0 %v1266
        %1529 = vmatpush1.bf16.msra.mxu0 %v1265
        %1530 = vmatprep.subr.bf16.mxu0 %v1272
        %1531 = vmatpush1.bf16.msra.mxu0 %v1271
        %1532 = vmatprep.subr.bf16.mxu0 %v1278
        %1533 = vmatpush1.bf16.msra.mxu0 %v1277
        %1534 = vmatprep.subr.bf16.mxu0 %v1284
        %1535 = vmatpush1.bf16.msra.mxu0 %v1283
        %1536 = vmatprep.subr.bf16.mxu0 %v1290
        %1537 = vmatpush1.bf16.msra.mxu0 %v1289
        %1538 = vmatprep.subr.bf16.mxu0 %v1296
        %1539 = vmatpush1.bf16.msra.mxu0 %v1295
        %1540 = vmatprep.mubr.bf16.mxu0 %v772
        %1541 = vmatmul.mubr.bf16.gmra.mrb[0].mxu0 %v771
        %v1542 = vpop.f32.mrb[0].mxu0
        %v1543 = vadd.f32 %v896, %v1542
        %v1544 = vpop.f32.mrb[0].mxu0
        %v1545 = vadd.f32 %v900, %v1544
        %v1546 = vpop.f32.mrb[0].mxu0
        %v1547 = vadd.f32 %v896, %v1546
        %v1548 = vpop.f32.mrb[0].mxu0
        %v1549 = vadd.f32 %v900, %v1548
        %1550 = vmatprep.mubr.bf16.mxu0 %v774
        %1551 = vmatmul.mubr.bf16.gmra.mrb[0].mxu0 %v773
        %v1552 = vpop.f32.mrb[0].mxu0
        %v1553 = vadd.f32 %v896, %v1552
        %v1554 = vpop.f32.mrb[0].mxu0
        %v1555 = vadd.f32 %v900, %v1554
        %v1556 = vpop.f32.mrb[0].mxu0
        %v1557 = vadd.f32 %v896, %v1556
        %v1558 = vpop.f32.mrb[0].mxu0
        %v1559 = vadd.f32 %v900, %v1558
        %1560 = vmatprep.mubr.bf16.mxu0 %v776
        %1561 = vmatmul.mubr.bf16.gmra.mrb[0].mxu0 %v775
        %v1562 = vpop.f32.mrb[0].mxu0
        %v1563 = vadd.f32 %v896, %v1562
        %v1564 = vpop.f32.mrb[0].mxu0
        %v1565 = vadd.f32 %v900, %v1564
        %v1566 = vpop.f32.mrb[0].mxu0
        %v1567 = vadd.f32 %v896, %v1566
        %v1568 = vpop.f32.mrb[0].mxu0
        %v1569 = vadd.f32 %v900, %v1568
        %1570 = vmatprep.mubr.bf16.mxu0 %v778
        %1571 = vmatmul.mubr.bf16.gmra.mrb[0].mxu0 %v777
        %v1572 = vpop.f32.mrb[0].mxu0
        %v1573 = vadd.f32 %v896, %v1572
        %v1574 = vpop.f32.mrb[0].mxu0
        %v1575 = vadd.f32 %v900, %v1574
        %v1576 = vpop.f32.mrb[0].mxu0
        %v1577 = vadd.f32 %v896, %v1576
        %v1578 = vpop.f32.mrb[0].mxu0
        %v1579 = vadd.f32 %v900, %v1578
        %1580 = vmatprep.mubr.bf16.mxu0 %v780
        %1581 = vmatmul.mubr.bf16.gmra.mrb[0].mxu0 %v779
        %v1582 = vpop.f32.mrb[0].mxu0
        %v1583 = vadd.f32 %v896, %v1582
        %v1584 = vpop.f32.mrb[0].mxu0
        %v1585 = vadd.f32 %v900, %v1584
        %v1586 = vpop.f32.mrb[0].mxu0
        %v1587 = vadd.f32 %v896, %v1586
        %v1588 = vpop.f32.mrb[0].mxu0
        %v1589 = vadd.f32 %v900, %v1588
        %1590 = vmatprep.mubr.bf16.mxu0 %v782
        %1591 = vmatmul.mubr.bf16.gmra.mrb[0].mxu0 %v781
        %v1592 = vpop.f32.mrb[0].mxu0
        %v1593 = vadd.f32 %v896, %v1592
        %v1594 = vpop.f32.mrb[0].mxu0
        %v1595 = vadd.f32 %v900, %v1594
        %v1596 = vpop.f32.mrb[0].mxu0
        %v1597 = vadd.f32 %v896, %v1596
        %v1598 = vpop.f32.mrb[0].mxu0
        %v1599 = vadd.f32 %v900, %v1598
        %1600 = vmatprep.mubr.bf16.mxu0 %v784
        %1601 = vmatmul.mubr.bf16.gmra.mrb[0].mxu0 %v783
        %v1602 = vpop.f32.mrb[0].mxu0
        %v1603 = vadd.f32 %v896, %v1602
        %v1604 = vpop.f32.mrb[0].mxu0
        %v1605 = vadd.f32 %v900, %v1604
        %v1606 = vpop.f32.mrb[0].mxu0
        %v1607 = vadd.f32 %v896, %v1606
        %v1608 = vpop.f32.mrb[0].mxu0
        %v1609 = vadd.f32 %v900, %v1608
        %1610 = vmatprep.mubr.bf16.mxu0 %v786
        %1611 = vmatmul.mubr.bf16.gmra.mrb[0].mxu0 %v785
        %v1612 = vpop.f32.mrb[0].mxu0
        %v1613 = vadd.f32 %v896, %v1612
        %v1614 = vpop.f32.mrb[0].mxu0
        %v1615 = vadd.f32 %v900, %v1614
        %v1616 = vpop.f32.mrb[0].mxu0
        %v1617 = vadd.f32 %v896, %v1616
        %v1618 = vpop.f32.mrb[0].mxu0
        %v1619 = vadd.f32 %v900, %v1618
        %1620 = vdwg.mxu0
        %1621 = vmatprep.subr.bf16.mxu0 %v1208
        %1622 = vmatpush1.bf16.msra.mxu0 %v1207
        %1623 = vmatprep.subr.bf16.mxu0 %v1214
        %1624 = vmatpush1.bf16.msra.mxu0 %v1213
        %1625 = vmatprep.subr.bf16.mxu0 %v1220
        %1626 = vmatpush1.bf16.msra.mxu0 %v1219
        %1627 = vmatprep.subr.bf16.mxu0 %v1226
        %1628 = vmatpush1.bf16.msra.mxu0 %v1225
        %1629 = vmatprep.subr.bf16.mxu0 %v1232
        %1630 = vmatpush1.bf16.msra.mxu0 %v1231
        %1631 = vmatprep.subr.bf16.mxu0 %v1238
        %1632 = vmatpush1.bf16.msra.mxu0 %v1237
        %1633 = vmatprep.subr.bf16.mxu0 %v1244
        %1634 = vmatpush1.bf16.msra.mxu0 %v1243
        %1635 = vmatprep.subr.bf16.mxu0 %v1250
        %1636 = vmatpush1.bf16.msra.mxu0 %v1249
        %1637 = vmatprep.subr.bf16.mxu0 %v1256
        %1638 = vmatpush1.bf16.msra.mxu0 %v1255
        %1639 = vmatprep.subr.bf16.mxu0 %v1262
        %1640 = vmatpush1.bf16.msra.mxu0 %v1261
        %1641 = vmatprep.subr.bf16.mxu0 %v1268
        %1642 = vmatpush1.bf16.msra.mxu0 %v1267
        %1643 = vmatprep.subr.bf16.mxu0 %v1274
        %1644 = vmatpush1.bf16.msra.mxu0 %v1273
        %1645 = vmatprep.subr.bf16.mxu0 %v1280
        %1646 = vmatpush1.bf16.msra.mxu0 %v1279
        %1647 = vmatprep.subr.bf16.mxu0 %v1286
        %1648 = vmatpush1.bf16.msra.mxu0 %v1285
        %1649 = vmatprep.subr.bf16.mxu0 %v1292
        %1650 = vmatpush1.bf16.msra.mxu0 %v1291
        %1651 = vmatprep.subr.bf16.mxu0 %v1298
        %1652 = vmatpush1.bf16.msra.mxu0 %v1297
        %1653 = vmatprep.mubr.bf16.mxu0 %v772
        %1654 = vmatmul.mubr.bf16.gmra.mrb[0].mxu0 %v771
        %v1655 = vpop.f32.mrb[0].mxu0
        %v1656 = vadd.f32 %v904, %v1655
        %v1657 = vpop.f32.mrb[0].mxu0
        %v1658 = vadd.f32 %v908, %v1657
        %v1659 = vpop.f32.mrb[0].mxu0
        %v1660 = vadd.f32 %v904, %v1659
        %v1661 = vpop.f32.mrb[0].mxu0
        %v1662 = vadd.f32 %v908, %v1661
        %1663 = vmatprep.mubr.bf16.mxu0 %v774
        %1664 = vmatmul.mubr.bf16.gmra.mrb[0].mxu0 %v773
        %v1665 = vpop.f32.mrb[0].mxu0
        %v1666 = vadd.f32 %v904, %v1665
        %v1667 = vpop.f32.mrb[0].mxu0
        %v1668 = vadd.f32 %v908, %v1667
        %v1669 = vpop.f32.mrb[0].mxu0
        %v1670 = vadd.f32 %v904, %v1669
        %v1671 = vpop.f32.mrb[0].mxu0
        %v1672 = vadd.f32 %v908, %v1671
        %1673 = vmatprep.mubr.bf16.mxu0 %v776
        %1674 = vmatmul.mubr.bf16.gmra.mrb[0].mxu0 %v775
        %v1675 = vpop.f32.mrb[0].mxu0
        %v1676 = vadd.f32 %v904, %v1675
        %v1677 = vpop.f32.mrb[0].mxu0
        %v1678 = vadd.f32 %v908, %v1677
        %v1679 = vpop.f32.mrb[0].mxu0
        %v1680 = vadd.f32 %v904, %v1679
        %v1681 = vpop.f32.mrb[0].mxu0
        %v1682 = vadd.f32 %v908, %v1681
        %1683 = vmatprep.mubr.bf16.mxu0 %v778
        %1684 = vmatmul.mubr.bf16.gmra.mrb[0].mxu0 %v777
        %v1685 = vpop.f32.mrb[0].mxu0
        %v1686 = vadd.f32 %v904, %v1685
        %v1687 = vpop.f32.mrb[0].mxu0
        %v1688 = vadd.f32 %v908, %v1687
        %v1689 = vpop.f32.mrb[0].mxu0
        %v1690 = vadd.f32 %v904, %v1689
        %v1691 = vpop.f32.mrb[0].mxu0
        %v1692 = vadd.f32 %v908, %v1691
        %1693 = vmatprep.mubr.bf16.mxu0 %v780
        %1694 = vmatmul.mubr.bf16.gmra.mrb[0].mxu0 %v779
        %v1695 = vpop.f32.mrb[0].mxu0
        %v1696 = vadd.f32 %v904, %v1695
        %v1697 = vpop.f32.mrb[0].mxu0
        %v1698 = vadd.f32 %v908, %v1697
        %v1699 = vpop.f32.mrb[0].mxu0
        %v1700 = vadd.f32 %v904, %v1699
        %v1701 = vpop.f32.mrb[0].mxu0
        %v1702 = vadd.f32 %v908, %v1701
        %1703 = vmatprep.mubr.bf16.mxu0 %v782
        %1704 = vmatmul.mubr.bf16.gmra.mrb[0].mxu0 %v781
        %v1705 = vpop.f32.mrb[0].mxu0
        %v1706 = vadd.f32 %v904, %v1705
        %v1707 = vpop.f32.mrb[0].mxu0
        %v1708 = vadd.f32 %v908, %v1707
        %v1709 = vpop.f32.mrb[0].mxu0
        %v1710 = vadd.f32 %v904, %v1709
        %v1711 = vpop.f32.mrb[0].mxu0
        %v1712 = vadd.f32 %v908, %v1711
        %1713 = vmatprep.mubr.bf16.mxu0 %v784
        %1714 = vmatmul.mubr.bf16.gmra.mrb[0].mxu0 %v783
        %v1715 = vpop.f32.mrb[0].mxu0
        %v1716 = vadd.f32 %v904, %v1715
        %v1717 = vpop.f32.mrb[0].mxu0
        %v1718 = vadd.f32 %v908, %v1717
        %v1719 = vpop.f32.mrb[0].mxu0
        %v1720 = vadd.f32 %v904, %v1719
        %v1721 = vpop.f32.mrb[0].mxu0
        %v1722 = vadd.f32 %v908, %v1721
        %1723 = vmatprep.mubr.bf16.mxu0 %v786
        %1724 = vmatmul.mubr.bf16.gmra.mrb[0].mxu0 %v785
        %v1725 = vpop.f32.mrb[0].mxu0
        %v1726 = vadd.f32 %v904, %v1725
        %v1727 = vpop.f32.mrb[0].mxu0
        %v1728 = vadd.f32 %v908, %v1727
        %v1729 = vpop.f32.mrb[0].mxu0
        %v1730 = vadd.f32 %v904, %v1729
        %v1731 = vpop.f32.mrb[0].mxu0
        %v1732 = vadd.f32 %v908, %v1731
        %1733 = vdwg.mxu0
        %v1734 = vmul.f32 %v1430, 0.125
        %v1735 = vmul.f32 %v1432, 0.125
        %v1736 = vmul.f32 %v1434, 0.125
        %v1737 = vmul.f32 %v1436, 0.125
        %v1738 = vmul.f32 %v1440, 0.125
        %v1739 = vmul.f32 %v1442, 0.125
        %v1740 = vmul.f32 %v1444, 0.125
        %v1741 = vmul.f32 %v1446, 0.125
        %v1742 = vmul.f32 %v1450, 0.125
        %v1743 = vmul.f32 %v1452, 0.125
        %v1744 = vmul.f32 %v1454, 0.125
        %v1745 = vmul.f32 %v1456, 0.125
        %v1746 = vmul.f32 %v1460, 0.125
        %v1747 = vmul.f32 %v1462, 0.125
        %v1748 = vmul.f32 %v1464, 0.125
        %v1749 = vmul.f32 %v1466, 0.125
        %v1750 = vmul.f32 %v1470, 0.125
        %v1751 = vmul.f32 %v1472, 0.125
        %v1752 = vmul.f32 %v1474, 0.125
        %v1753 = vmul.f32 %v1476, 0.125
        %v1754 = vmul.f32 %v1480, 0.125
        %v1755 = vmul.f32 %v1482, 0.125
        %v1756 = vmul.f32 %v1484, 0.125
        %v1757 = vmul.f32 %v1486, 0.125
        %v1758 = vmul.f32 %v1490, 0.125
        %v1759 = vmul.f32 %v1492, 0.125
        %v1760 = vmul.f32 %v1494, 0.125
        %v1761 = vmul.f32 %v1496, 0.125
        %v1762 = vmul.f32 %v1500, 0.125
        %v1763 = vmul.f32 %v1502, 0.125
        %v1764 = vmul.f32 %v1504, 0.125
        %v1765 = vmul.f32 %v1506, 0.125
        %v1766 = vpack.c.bf16 %v1736, %v1734
        %v1767 = vpack.c.bf16 %v1737, %v1735
        %v1768 = vpack.c.bf16 %v1740, %v1738
        %v1769 = vpack.c.bf16 %v1741, %v1739
        %v1770 = vpack.c.bf16 %v1744, %v1742
        %v1771 = vpack.c.bf16 %v1745, %v1743
        %v1772 = vpack.c.bf16 %v1748, %v1746
        %v1773 = vpack.c.bf16 %v1749, %v1747
        %v1774 = vpack.c.bf16 %v1752, %v1750
        %v1775 = vpack.c.bf16 %v1753, %v1751
        %v1776 = vpack.c.bf16 %v1756, %v1754
        %v1777 = vpack.c.bf16 %v1757, %v1755
        %v1778 = vpack.c.bf16 %v1760, %v1758
        %v1779 = vpack.c.bf16 %v1761, %v1759
        %v1780 = vpack.c.bf16 %v1764, %v1762
        %v1781 = vpack.c.bf16 %v1765, %v1763
        %v1782 = vpack.c.bf16 %v1547, %v1543
        %v1783 = vpack.c.bf16 %v1549, %v1545
        %v1784 = vpack.c.bf16 %v1557, %v1553
        %v1785 = vpack.c.bf16 %v1559, %v1555
        %v1786 = vpack.c.bf16 %v1567, %v1563
        %v1787 = vpack.c.bf16 %v1569, %v1565
        %v1788 = vpack.c.bf16 %v1577, %v1573
        %v1789 = vpack.c.bf16 %v1579, %v1575
        %v1790 = vpack.c.bf16 %v1587, %v1583
        %v1791 = vpack.c.bf16 %v1589, %v1585
        %v1792 = vpack.c.bf16 %v1597, %v1593
        %v1793 = vpack.c.bf16 %v1599, %v1595
        %v1794 = vpack.c.bf16 %v1607, %v1603
        %v1795 = vpack.c.bf16 %v1609, %v1605
        %v1796 = vpack.c.bf16 %v1617, %v1613
        %v1797 = vpack.c.bf16 %v1619, %v1615
        %v1798 = vpack.c.bf16 %v1660, %v1656
        %v1799 = vpack.c.bf16 %v1662, %v1658
        %v1800 = vpack.c.bf16 %v1670, %v1666
        %v1801 = vpack.c.bf16 %v1672, %v1668
        %v1802 = vpack.c.bf16 %v1680, %v1676
        %v1803 = vpack.c.bf16 %v1682, %v1678
        %v1804 = vpack.c.bf16 %v1690, %v1686
        %v1805 = vpack.c.bf16 %v1692, %v1688
        %v1806 = vpack.c.bf16 %v1700, %v1696
        %v1807 = vpack.c.bf16 %v1702, %v1698
        %v1808 = vpack.c.bf16 %v1710, %v1706
        %v1809 = vpack.c.bf16 %v1712, %v1708
        %v1810 = vpack.c.bf16 %v1720, %v1716
        %v1811 = vpack.c.bf16 %v1722, %v1718
        %v1812 = vpack.c.bf16 %v1730, %v1726
        %v1813 = vpack.c.bf16 %v1732, %v1728
        %v1822 = vunpack.c.l.b16 %v1766
        %v1823 = vunpack.c.h.b16 %v1766
        %v1824 = vunpack.c.l.b16 %v1768
        %v1825 = vunpack.c.h.b16 %v1768
        %v1826 = vunpack.c.l.b16 %v1770
        %v1827 = vunpack.c.h.b16 %v1770
        %v1828 = vunpack.c.l.b16 %v1772
        %v1829 = vunpack.c.h.b16 %v1772
        %v1830 = vunpack.c.l.b16 %v1774
        %v1831 = vunpack.c.h.b16 %v1774
        %v1832 = vunpack.c.l.b16 %v1776
        %v1833 = vunpack.c.h.b16 %v1776
        %v1834 = vunpack.c.l.b16 %v1778
        %v1835 = vunpack.c.h.b16 %v1778
        %v1836 = vunpack.c.l.b16 %v1780
        %v1837 = vunpack.c.h.b16 %v1780
        %v1838 = vpack.c.b16 %v1822, %v1822
        %v1839 = vpack.c.b16 %v1823, %v1823
        %v1840 = vpack.c.b16 %v1824, %v1824
        %v1841 = vpack.c.b16 %v1825, %v1825
        %v1842 = vpack.c.b16 %v1826, %v1826
        %v1843 = vpack.c.b16 %v1827, %v1827
        %v1844 = vpack.c.b16 %v1828, %v1828
        %v1845 = vpack.c.b16 %v1829, %v1829
        %v1846 = vpack.c.b16 %v1830, %v1830
        %v1847 = vpack.c.b16 %v1831, %v1831
        %v1848 = vpack.c.b16 %v1832, %v1832
        %v1849 = vpack.c.b16 %v1833, %v1833
        %v1850 = vpack.c.b16 %v1834, %v1834
        %v1851 = vpack.c.b16 %v1835, %v1835
        %v1852 = vpack.c.b16 %v1836, %v1836
        %v1853 = vpack.c.b16 %v1837, %v1837
        %vm1870 = vcmask 519168
        %1871 = vst.msk [vmem:[%s375] sm:$0xf] %vm1870, %v1838
        %1872 = vst.msk [vmem:[%s375 + $0x4] sm:$0xf] %vm1870, %v1839
        %1873 = vst.msk [vmem:[%s375 + $0x8] sm:$0xf] %vm1870, %v1840
        %1874 = vst.msk [vmem:[%s375 + $0xc] sm:$0xf] %vm1870, %v1841
        %1875 = vst.msk [vmem:[%s375 + $0x10] sm:$0xf] %vm1870, %v1842
        %1876 = vst.msk [vmem:[%s375 + $0x14] sm:$0xf] %vm1870, %v1843
        %1877 = vst.msk [vmem:[%s375 + $0x18] sm:$0xf] %vm1870, %v1844
        %1878 = vst.msk [vmem:[%s375 + $0x1c] sm:$0xf] %vm1870, %v1845
        %1879 = vst.msk [vmem:[%s375 + $0x20] sm:$0xf] %vm1870, %v1846
        %1880 = vst.msk [vmem:[%s375 + $0x24] sm:$0xf] %vm1870, %v1847
        %1881 = vst.msk [vmem:[%s375 + $0x28] sm:$0xf] %vm1870, %v1848
        %1882 = vst.msk [vmem:[%s375 + $0x2c] sm:$0xf] %vm1870, %v1849
        %1883 = vst.msk [vmem:[%s375 + $0x30] sm:$0xf] %vm1870, %v1850
        %1884 = vst.msk [vmem:[%s375 + $0x34] sm:$0xf] %vm1870, %v1851
        %1885 = vst.msk [vmem:[%s375 + $0x38] sm:$0xf] %vm1870, %v1852
        %1886 = vst.msk [vmem:[%s375 + $0x3c] sm:$0xf] %vm1870, %v1853
        %v1895 = vunpack.c.l.b16 %v1782
        %v1896 = vunpack.c.h.b16 %v1782
        %v1897 = vunpack.c.l.b16 %v1784
        %v1898 = vunpack.c.h.b16 %v1784
        %v1899 = vunpack.c.l.b16 %v1786
        %v1900 = vunpack.c.h.b16 %v1786
        %v1901 = vunpack.c.l.b16 %v1788
        %v1902 = vunpack.c.h.b16 %v1788
        %v1903 = vunpack.c.l.b16 %v1790
        %v1904 = vunpack.c.h.b16 %v1790
        %v1905 = vunpack.c.l.b16 %v1792
        %v1906 = vunpack.c.h.b16 %v1792
        %v1907 = vunpack.c.l.b16 %v1794
        %v1908 = vunpack.c.h.b16 %v1794
        %v1909 = vunpack.c.l.b16 %v1796
        %v1910 = vunpack.c.h.b16 %v1796
        %v1911 = vpack.c.b16 %v1895, %v1895
        %v1912 = vpack.c.b16 %v1896, %v1896
        %v1913 = vpack.c.b16 %v1897, %v1897
        %v1914 = vpack.c.b16 %v1898, %v1898
        %v1915 = vpack.c.b16 %v1899, %v1899
        %v1916 = vpack.c.b16 %v1900, %v1900
        %v1917 = vpack.c.b16 %v1901, %v1901
        %v1918 = vpack.c.b16 %v1902, %v1902
        %v1919 = vpack.c.b16 %v1903, %v1903
        %v1920 = vpack.c.b16 %v1904, %v1904
        %v1921 = vpack.c.b16 %v1905, %v1905
        %v1922 = vpack.c.b16 %v1906, %v1906
        %v1923 = vpack.c.b16 %v1907, %v1907
        %v1924 = vpack.c.b16 %v1908, %v1908
        %v1925 = vpack.c.b16 %v1909, %v1909
        %v1926 = vpack.c.b16 %v1910, %v1910
        %1943 = vst.msk [vmem:[%s382] sm:$0xf] %vm1870, %v1911
        %1944 = vst.msk [vmem:[%s382 + $0x4] sm:$0xf] %vm1870, %v1912
        %1945 = vst.msk [vmem:[%s382 + $0x8] sm:$0xf] %vm1870, %v1913
        %1946 = vst.msk [vmem:[%s382 + $0xc] sm:$0xf] %vm1870, %v1914
        %1947 = vst.msk [vmem:[%s382 + $0x10] sm:$0xf] %vm1870, %v1915
        %1948 = vst.msk [vmem:[%s382 + $0x14] sm:$0xf] %vm1870, %v1916
        %1949 = vst.msk [vmem:[%s382 + $0x18] sm:$0xf] %vm1870, %v1917
        %1950 = vst.msk [vmem:[%s382 + $0x1c] sm:$0xf] %vm1870, %v1918
        %1951 = vst.msk [vmem:[%s382 + $0x20] sm:$0xf] %vm1870, %v1919
        %1952 = vst.msk [vmem:[%s382 + $0x24] sm:$0xf] %vm1870, %v1920
        %1953 = vst.msk [vmem:[%s382 + $0x28] sm:$0xf] %vm1870, %v1921
        %1954 = vst.msk [vmem:[%s382 + $0x2c] sm:$0xf] %vm1870, %v1922
        %1955 = vst.msk [vmem:[%s382 + $0x30] sm:$0xf] %vm1870, %v1923
        %1956 = vst.msk [vmem:[%s382 + $0x34] sm:$0xf] %vm1870, %v1924
        %1957 = vst.msk [vmem:[%s382 + $0x38] sm:$0xf] %vm1870, %v1925
        %1958 = vst.msk [vmem:[%s382 + $0x3c] sm:$0xf] %vm1870, %v1926
        %v1967 = vunpack.c.l.b16 %v1798
        %v1968 = vunpack.c.h.b16 %v1798
        %v1969 = vunpack.c.l.b16 %v1800
        %v1970 = vunpack.c.h.b16 %v1800
        %v1971 = vunpack.c.l.b16 %v1802
        %v1972 = vunpack.c.h.b16 %v1802
        %v1973 = vunpack.c.l.b16 %v1804
        %v1974 = vunpack.c.h.b16 %v1804
        %v1975 = vunpack.c.l.b16 %v1806
        %v1976 = vunpack.c.h.b16 %v1806
        %v1977 = vunpack.c.l.b16 %v1808
        %v1978 = vunpack.c.h.b16 %v1808
        %v1979 = vunpack.c.l.b16 %v1810
        %v1980 = vunpack.c.h.b16 %v1810
        %v1981 = vunpack.c.l.b16 %v1812
        %v1982 = vunpack.c.h.b16 %v1812
        %v1983 = vpack.c.b16 %v1967, %v1967
        %v1984 = vpack.c.b16 %v1968, %v1968
        %v1985 = vpack.c.b16 %v1969, %v1969
        %v1986 = vpack.c.b16 %v1970, %v1970
        %v1987 = vpack.c.b16 %v1971, %v1971
        %v1988 = vpack.c.b16 %v1972, %v1972
        %v1989 = vpack.c.b16 %v1973, %v1973
        %v1990 = vpack.c.b16 %v1974, %v1974
        %v1991 = vpack.c.b16 %v1975, %v1975
        %v1992 = vpack.c.b16 %v1976, %v1976
        %v1993 = vpack.c.b16 %v1977, %v1977
        %v1994 = vpack.c.b16 %v1978, %v1978
        %v1995 = vpack.c.b16 %v1979, %v1979
        %v1996 = vpack.c.b16 %v1980, %v1980
        %v1997 = vpack.c.b16 %v1981, %v1981
        %v1998 = vpack.c.b16 %v1982, %v1982
        %2015 = vst.msk [vmem:[%s389] sm:$0xf] %vm1870, %v1983
        %2016 = vst.msk [vmem:[%s389 + $0x4] sm:$0xf] %vm1870, %v1984
        %2017 = vst.msk [vmem:[%s389 + $0x8] sm:$0xf] %vm1870, %v1985
        %2018 = vst.msk [vmem:[%s389 + $0xc] sm:$0xf] %vm1870, %v1986
        %2019 = vst.msk [vmem:[%s389 + $0x10] sm:$0xf] %vm1870, %v1987
        %2020 = vst.msk [vmem:[%s389 + $0x14] sm:$0xf] %vm1870, %v1988
        %2021 = vst.msk [vmem:[%s389 + $0x18] sm:$0xf] %vm1870, %v1989
        %2022 = vst.msk [vmem:[%s389 + $0x1c] sm:$0xf] %vm1870, %v1990
        %2023 = vst.msk [vmem:[%s389 + $0x20] sm:$0xf] %vm1870, %v1991
        %2024 = vst.msk [vmem:[%s389 + $0x24] sm:$0xf] %vm1870, %v1992
        %2025 = vst.msk [vmem:[%s389 + $0x28] sm:$0xf] %vm1870, %v1993
        %2026 = vst.msk [vmem:[%s389 + $0x2c] sm:$0xf] %vm1870, %v1994
        %2027 = vst.msk [vmem:[%s389 + $0x30] sm:$0xf] %vm1870, %v1995
        %2028 = vst.msk [vmem:[%s389 + $0x34] sm:$0xf] %vm1870, %v1996
        %2029 = vst.msk [vmem:[%s389 + $0x38] sm:$0xf] %vm1870, %v1997
        %2030 = vst.msk [vmem:[%s389 + $0x3c] sm:$0xf] %vm1870, %v1998
        %2031 = vrot.lane.b32.xlu0 %v1838, 64
        %v2032 = vpop.permute.xlu0 %2031
        %2033 = vrot.lane.b32.xlu0 %v1839, 64
        %v2034 = vpop.permute.xlu0 %2033
        %2035 = vrot.lane.b32.xlu0 %v1840, 64
        %v2036 = vpop.permute.xlu0 %2035
        %2037 = vrot.lane.b32.xlu0 %v1841, 64
        %v2038 = vpop.permute.xlu0 %2037
        %2039 = vrot.lane.b32.xlu0 %v1842, 64
        %v2040 = vpop.permute.xlu0 %2039
        %2041 = vrot.lane.b32.xlu0 %v1843, 64
        %v2042 = vpop.permute.xlu0 %2041
        %2043 = vrot.lane.b32.xlu0 %v1844, 64
        %v2044 = vpop.permute.xlu0 %2043
        %2045 = vrot.lane.b32.xlu0 %v1845, 64
        %v2046 = vpop.permute.xlu0 %2045
        %2047 = vrot.lane.b32.xlu0 %v1846, 64
        %v2048 = vpop.permute.xlu0 %2047
        %2049 = vrot.lane.b32.xlu0 %v1847, 64
        %v2050 = vpop.permute.xlu0 %2049
        %2051 = vrot.lane.b32.xlu0 %v1848, 64
        %v2052 = vpop.permute.xlu0 %2051
        %2053 = vrot.lane.b32.xlu0 %v1849, 64
        %v2054 = vpop.permute.xlu0 %2053
        %2055 = vrot.lane.b32.xlu0 %v1850, 64
        %v2056 = vpop.permute.xlu0 %2055
        %2057 = vrot.lane.b32.xlu0 %v1851, 64
        %v2058 = vpop.permute.xlu0 %2057
        %2059 = vrot.lane.b32.xlu0 %v1852, 64
        %v2060 = vpop.permute.xlu0 %2059
        %2061 = vrot.lane.b32.xlu0 %v1853, 64
        %v2062 = vpop.permute.xlu0 %2061
        %s2079 = scalar_lea.vmem %s375, 64 [#allocation11]
        %2080 = vst.msk [vmem:[%s2079] sm:$0xf] %vm1870, %v2032
        %2081 = vst.msk [vmem:[%s2079 + $0x4] sm:$0xf] %vm1870, %v2034
        %2082 = vst.msk [vmem:[%s2079 + $0x8] sm:$0xf] %vm1870, %v2036
        %2083 = vst.msk [vmem:[%s2079 + $0xc] sm:$0xf] %vm1870, %v2038
        %2084 = vst.msk [vmem:[%s2079 + $0x10] sm:$0xf] %vm1870, %v2040
        %2085 = vst.msk [vmem:[%s2079 + $0x14] sm:$0xf] %vm1870, %v2042
        %2086 = vst.msk [vmem:[%s2079 + $0x18] sm:$0xf] %vm1870, %v2044
        %2087 = vst.msk [vmem:[%s2079 + $0x1c] sm:$0xf] %vm1870, %v2046
        %2088 = vst.msk [vmem:[%s2079 + $0x20] sm:$0xf] %vm1870, %v2048
        %2089 = vst.msk [vmem:[%s2079 + $0x24] sm:$0xf] %vm1870, %v2050
        %2090 = vst.msk [vmem:[%s2079 + $0x28] sm:$0xf] %vm1870, %v2052
        %2091 = vst.msk [vmem:[%s2079 + $0x2c] sm:$0xf] %vm1870, %v2054
        %2092 = vst.msk [vmem:[%s2079 + $0x30] sm:$0xf] %vm1870, %v2056
        %2093 = vst.msk [vmem:[%s2079 + $0x34] sm:$0xf] %vm1870, %v2058
        %2094 = vst.msk [vmem:[%s2079 + $0x38] sm:$0xf] %vm1870, %v2060
        %2095 = vst.msk [vmem:[%s2079 + $0x3c] sm:$0xf] %vm1870, %v2062
        %2096 = vrot.lane.b32.xlu0 %v1911, 64
        %v2097 = vpop.permute.xlu0 %2096
        %2098 = vrot.lane.b32.xlu0 %v1912, 64
        %v2099 = vpop.permute.xlu0 %2098
        %2100 = vrot.lane.b32.xlu0 %v1913, 64
        %v2101 = vpop.permute.xlu0 %2100
        %2102 = vrot.lane.b32.xlu0 %v1914, 64
        %v2103 = vpop.permute.xlu0 %2102
        %2104 = vrot.lane.b32.xlu0 %v1915, 64
        %v2105 = vpop.permute.xlu0 %2104
        %2106 = vrot.lane.b32.xlu0 %v1916, 64
        %v2107 = vpop.permute.xlu0 %2106
        %2108 = vrot.lane.b32.xlu0 %v1917, 64
        %v2109 = vpop.permute.xlu0 %2108
        %2110 = vrot.lane.b32.xlu0 %v1918, 64
        %v2111 = vpop.permute.xlu0 %2110
        %2112 = vrot.lane.b32.xlu0 %v1919, 64
        %v2113 = vpop.permute.xlu0 %2112
        %2114 = vrot.lane.b32.xlu0 %v1920, 64
        %v2115 = vpop.permute.xlu0 %2114
        %2116 = vrot.lane.b32.xlu0 %v1921, 64
        %v2117 = vpop.permute.xlu0 %2116
        %2118 = vrot.lane.b32.xlu0 %v1922, 64
        %v2119 = vpop.permute.xlu0 %2118
        %2120 = vrot.lane.b32.xlu0 %v1923, 64
        %v2121 = vpop.permute.xlu0 %2120
        %2122 = vrot.lane.b32.xlu0 %v1924, 64
        %v2123 = vpop.permute.xlu0 %2122
        %2124 = vrot.lane.b32.xlu0 %v1925, 64
        %v2125 = vpop.permute.xlu0 %2124
        %2126 = vrot.lane.b32.xlu0 %v1926, 64
        %v2127 = vpop.permute.xlu0 %2126
        %s2144 = scalar_lea.vmem %s382, 64 [#allocation12]
        %2145 = vst.msk [vmem:[%s2144] sm:$0xf] %vm1870, %v2097
        %2146 = vst.msk [vmem:[%s2144 + $0x4] sm:$0xf] %vm1870, %v2099
        %2147 = vst.msk [vmem:[%s2144 + $0x8] sm:$0xf] %vm1870, %v2101
        %2148 = vst.msk [vmem:[%s2144 + $0xc] sm:$0xf] %vm1870, %v2103
        %2149 = vst.msk [vmem:[%s2144 + $0x10] sm:$0xf] %vm1870, %v2105
        %2150 = vst.msk [vmem:[%s2144 + $0x14] sm:$0xf] %vm1870, %v2107
        %2151 = vst.msk [vmem:[%s2144 + $0x18] sm:$0xf] %vm1870, %v2109
        %2152 = vst.msk [vmem:[%s2144 + $0x1c] sm:$0xf] %vm1870, %v2111
        %2153 = vst.msk [vmem:[%s2144 + $0x20] sm:$0xf] %vm1870, %v2113
        %2154 = vst.msk [vmem:[%s2144 + $0x24] sm:$0xf] %vm1870, %v2115
        %2155 = vst.msk [vmem:[%s2144 + $0x28] sm:$0xf] %vm1870, %v2117
        %2156 = vst.msk [vmem:[%s2144 + $0x2c] sm:$0xf] %vm1870, %v2119
        %2157 = vst.msk [vmem:[%s2144 + $0x30] sm:$0xf] %vm1870, %v2121
        %2158 = vst.msk [vmem:[%s2144 + $0x34] sm:$0xf] %vm1870, %v2123
        %2159 = vst.msk [vmem:[%s2144 + $0x38] sm:$0xf] %vm1870, %v2125
        %2160 = vst.msk [vmem:[%s2144 + $0x3c] sm:$0xf] %vm1870, %v2127
        %2161 = vrot.lane.b32.xlu0 %v1983, 64
        %v2162 = vpop.permute.xlu0 %2161
        %2163 = vrot.lane.b32.xlu0 %v1984, 64
        %v2164 = vpop.permute.xlu0 %2163
        %2165 = vrot.lane.b32.xlu0 %v1985, 64
        %v2166 = vpop.permute.xlu0 %2165
        %2167 = vrot.lane.b32.xlu0 %v1986, 64
        %v2168 = vpop.permute.xlu0 %2167
        %2169 = vrot.lane.b32.xlu0 %v1987, 64
        %v2170 = vpop.permute.xlu0 %2169
        %2171 = vrot.lane.b32.xlu0 %v1988, 64
        %v2172 = vpop.permute.xlu0 %2171
        %2173 = vrot.lane.b32.xlu0 %v1989, 64
        %v2174 = vpop.permute.xlu0 %2173
        %2175 = vrot.lane.b32.xlu0 %v1990, 64
        %v2176 = vpop.permute.xlu0 %2175
        %2177 = vrot.lane.b32.xlu0 %v1991, 64
        %v2178 = vpop.permute.xlu0 %2177
        %2179 = vrot.lane.b32.xlu0 %v1992, 64
        %v2180 = vpop.permute.xlu0 %2179
        %2181 = vrot.lane.b32.xlu0 %v1993, 64
        %v2182 = vpop.permute.xlu0 %2181
        %2183 = vrot.lane.b32.xlu0 %v1994, 64
        %v2184 = vpop.permute.xlu0 %2183
        %2185 = vrot.lane.b32.xlu0 %v1995, 64
        %v2186 = vpop.permute.xlu0 %2185
        %2187 = vrot.lane.b32.xlu0 %v1996, 64
        %v2188 = vpop.permute.xlu0 %2187
        %2189 = vrot.lane.b32.xlu0 %v1997, 64
        %v2190 = vpop.permute.xlu0 %2189
        %2191 = vrot.lane.b32.xlu0 %v1998, 64
        %v2192 = vpop.permute.xlu0 %2191
        %s2209 = scalar_lea.vmem %s389, 64 [#allocation14]
        %2210 = vst.msk [vmem:[%s2209] sm:$0xf] %vm1870, %v2162
        %2211 = vst.msk [vmem:[%s2209 + $0x4] sm:$0xf] %vm1870, %v2164
        %2212 = vst.msk [vmem:[%s2209 + $0x8] sm:$0xf] %vm1870, %v2166
        %2213 = vst.msk [vmem:[%s2209 + $0xc] sm:$0xf] %vm1870, %v2168
        %2214 = vst.msk [vmem:[%s2209 + $0x10] sm:$0xf] %vm1870, %v2170
        %2215 = vst.msk [vmem:[%s2209 + $0x14] sm:$0xf] %vm1870, %v2172
        %2216 = vst.msk [vmem:[%s2209 + $0x18] sm:$0xf] %vm1870, %v2174
        %2217 = vst.msk [vmem:[%s2209 + $0x1c] sm:$0xf] %vm1870, %v2176
        %2218 = vst.msk [vmem:[%s2209 + $0x20] sm:$0xf] %vm1870, %v2178
        %2219 = vst.msk [vmem:[%s2209 + $0x24] sm:$0xf] %vm1870, %v2180
        %2220 = vst.msk [vmem:[%s2209 + $0x28] sm:$0xf] %vm1870, %v2182
        %2221 = vst.msk [vmem:[%s2209 + $0x2c] sm:$0xf] %vm1870, %v2184
        %2222 = vst.msk [vmem:[%s2209 + $0x30] sm:$0xf] %vm1870, %v2186
        %2223 = vst.msk [vmem:[%s2209 + $0x34] sm:$0xf] %vm1870, %v2188
        %2224 = vst.msk [vmem:[%s2209 + $0x38] sm:$0xf] %vm1870, %v2190
        %2225 = vst.msk [vmem:[%s2209 + $0x3c] sm:$0xf] %vm1870, %v2192
        %v2234 = vunpack.c.l.b16 %v1767
        %v2235 = vunpack.c.h.b16 %v1767
        %v2236 = vunpack.c.l.b16 %v1769
        %v2237 = vunpack.c.h.b16 %v1769
        %v2238 = vunpack.c.l.b16 %v1771
        %v2239 = vunpack.c.h.b16 %v1771
        %v2240 = vunpack.c.l.b16 %v1773
        %v2241 = vunpack.c.h.b16 %v1773
        %v2242 = vunpack.c.l.b16 %v1775
        %v2243 = vunpack.c.h.b16 %v1775
        %v2244 = vunpack.c.l.b16 %v1777
        %v2245 = vunpack.c.h.b16 %v1777
        %v2246 = vunpack.c.l.b16 %v1779
        %v2247 = vunpack.c.h.b16 %v1779
        %v2248 = vunpack.c.l.b16 %v1781
        %v2249 = vunpack.c.h.b16 %v1781
        %v2250 = vpack.c.b16 %v2234, %v2234
        %v2251 = vpack.c.b16 %v2235, %v2235
        %v2252 = vpack.c.b16 %v2236, %v2236
        %v2253 = vpack.c.b16 %v2237, %v2237
        %v2254 = vpack.c.b16 %v2238, %v2238
        %v2255 = vpack.c.b16 %v2239, %v2239
        %v2256 = vpack.c.b16 %v2240, %v2240
        %v2257 = vpack.c.b16 %v2241, %v2241
        %v2258 = vpack.c.b16 %v2242, %v2242
        %v2259 = vpack.c.b16 %v2243, %v2243
        %v2260 = vpack.c.b16 %v2244, %v2244
        %v2261 = vpack.c.b16 %v2245, %v2245
        %v2262 = vpack.c.b16 %v2246, %v2246
        %v2263 = vpack.c.b16 %v2247, %v2247
        %v2264 = vpack.c.b16 %v2248, %v2248
        %v2265 = vpack.c.b16 %v2249, %v2249
        %s2282 = scalar_lea.vmem %s375, 128 [#allocation11]
        %2283 = vst.msk [vmem:[%s2282] sm:$0xf] %vm1870, %v2250
        %2284 = vst.msk [vmem:[%s2282 + $0x4] sm:$0xf] %vm1870, %v2251
        %2285 = vst.msk [vmem:[%s2282 + $0x8] sm:$0xf] %vm1870, %v2252
        %2286 = vst.msk [vmem:[%s2282 + $0xc] sm:$0xf] %vm1870, %v2253
        %2287 = vst.msk [vmem:[%s2282 + $0x10] sm:$0xf] %vm1870, %v2254
        %2288 = vst.msk [vmem:[%s2282 + $0x14] sm:$0xf] %vm1870, %v2255
        %2289 = vst.msk [vmem:[%s2282 + $0x18] sm:$0xf] %vm1870, %v2256
        %2290 = vst.msk [vmem:[%s2282 + $0x1c] sm:$0xf] %vm1870, %v2257
        %2291 = vst.msk [vmem:[%s2282 + $0x20] sm:$0xf] %vm1870, %v2258
        %2292 = vst.msk [vmem:[%s2282 + $0x24] sm:$0xf] %vm1870, %v2259
        %2293 = vst.msk [vmem:[%s2282 + $0x28] sm:$0xf] %vm1870, %v2260
        %2294 = vst.msk [vmem:[%s2282 + $0x2c] sm:$0xf] %vm1870, %v2261
        %2295 = vst.msk [vmem:[%s2282 + $0x30] sm:$0xf] %vm1870, %v2262
        %2296 = vst.msk [vmem:[%s2282 + $0x34] sm:$0xf] %vm1870, %v2263
        %2297 = vst.msk [vmem:[%s2282 + $0x38] sm:$0xf] %vm1870, %v2264
        %2298 = vst.msk [vmem:[%s2282 + $0x3c] sm:$0xf] %vm1870, %v2265
        %v2307 = vunpack.c.l.b16 %v1783
        %v2308 = vunpack.c.h.b16 %v1783
        %v2309 = vunpack.c.l.b16 %v1785
        %v2310 = vunpack.c.h.b16 %v1785
        %v2311 = vunpack.c.l.b16 %v1787
        %v2312 = vunpack.c.h.b16 %v1787
        %v2313 = vunpack.c.l.b16 %v1789
        %v2314 = vunpack.c.h.b16 %v1789
        %v2315 = vunpack.c.l.b16 %v1791
        %v2316 = vunpack.c.h.b16 %v1791
        %v2317 = vunpack.c.l.b16 %v1793
        %v2318 = vunpack.c.h.b16 %v1793
        %v2319 = vunpack.c.l.b16 %v1795
        %v2320 = vunpack.c.h.b16 %v1795
        %v2321 = vunpack.c.l.b16 %v1797
        %v2322 = vunpack.c.h.b16 %v1797
        %v2323 = vpack.c.b16 %v2307, %v2307
        %v2324 = vpack.c.b16 %v2308, %v2308
        %v2325 = vpack.c.b16 %v2309, %v2309
        %v2326 = vpack.c.b16 %v2310, %v2310
        %v2327 = vpack.c.b16 %v2311, %v2311
        %v2328 = vpack.c.b16 %v2312, %v2312
        %v2329 = vpack.c.b16 %v2313, %v2313
        %v2330 = vpack.c.b16 %v2314, %v2314
        %v2331 = vpack.c.b16 %v2315, %v2315
        %v2332 = vpack.c.b16 %v2316, %v2316
        %v2333 = vpack.c.b16 %v2317, %v2317
        %v2334 = vpack.c.b16 %v2318, %v2318
        %v2335 = vpack.c.b16 %v2319, %v2319
        %v2336 = vpack.c.b16 %v2320, %v2320
        %v2337 = vpack.c.b16 %v2321, %v2321
        %v2338 = vpack.c.b16 %v2322, %v2322
        %s2355 = scalar_lea.vmem %s382, 128 [#allocation12]
        %2356 = vst.msk [vmem:[%s2355] sm:$0xf] %vm1870, %v2323
        %2357 = vst.msk [vmem:[%s2355 + $0x4] sm:$0xf] %vm1870, %v2324
        %2358 = vst.msk [vmem:[%s2355 + $0x8] sm:$0xf] %vm1870, %v2325
        %2359 = vst.msk [vmem:[%s2355 + $0xc] sm:$0xf] %vm1870, %v2326
        %2360 = vst.msk [vmem:[%s2355 + $0x10] sm:$0xf] %vm1870, %v2327
        %2361 = vst.msk [vmem:[%s2355 + $0x14] sm:$0xf] %vm1870, %v2328
        %2362 = vst.msk [vmem:[%s2355 + $0x18] sm:$0xf] %vm1870, %v2329
        %2363 = vst.msk [vmem:[%s2355 + $0x1c] sm:$0xf] %vm1870, %v2330
        %2364 = vst.msk [vmem:[%s2355 + $0x20] sm:$0xf] %vm1870, %v2331
        %2365 = vst.msk [vmem:[%s2355 + $0x24] sm:$0xf] %vm1870, %v2332
        %2366 = vst.msk [vmem:[%s2355 + $0x28] sm:$0xf] %vm1870, %v2333
        %2367 = vst.msk [vmem:[%s2355 + $0x2c] sm:$0xf] %vm1870, %v2334
        %2368 = vst.msk [vmem:[%s2355 + $0x30] sm:$0xf] %vm1870, %v2335
        %2369 = vst.msk [vmem:[%s2355 + $0x34] sm:$0xf] %vm1870, %v2336
        %2370 = vst.msk [vmem:[%s2355 + $0x38] sm:$0xf] %vm1870, %v2337
        %2371 = vst.msk [vmem:[%s2355 + $0x3c] sm:$0xf] %vm1870, %v2338
        %v2380 = vunpack.c.l.b16 %v1799
        %v2381 = vunpack.c.h.b16 %v1799
        %v2382 = vunpack.c.l.b16 %v1801
        %v2383 = vunpack.c.h.b16 %v1801
        %v2384 = vunpack.c.l.b16 %v1803
        %v2385 = vunpack.c.h.b16 %v1803
        %v2386 = vunpack.c.l.b16 %v1805
        %v2387 = vunpack.c.h.b16 %v1805
        %v2388 = vunpack.c.l.b16 %v1807
        %v2389 = vunpack.c.h.b16 %v1807
        %v2390 = vunpack.c.l.b16 %v1809
        %v2391 = vunpack.c.h.b16 %v1809
        %v2392 = vunpack.c.l.b16 %v1811
        %v2393 = vunpack.c.h.b16 %v1811
        %v2394 = vunpack.c.l.b16 %v1813
        %v2395 = vunpack.c.h.b16 %v1813
        %v2396 = vpack.c.b16 %v2380, %v2380
        %v2397 = vpack.c.b16 %v2381, %v2381
        %v2398 = vpack.c.b16 %v2382, %v2382
        %v2399 = vpack.c.b16 %v2383, %v2383
        %v2400 = vpack.c.b16 %v2384, %v2384
        %v2401 = vpack.c.b16 %v2385, %v2385
        %v2402 = vpack.c.b16 %v2386, %v2386
        %v2403 = vpack.c.b16 %v2387, %v2387
        %v2404 = vpack.c.b16 %v2388, %v2388
        %v2405 = vpack.c.b16 %v2389, %v2389
        %v2406 = vpack.c.b16 %v2390, %v2390
        %v2407 = vpack.c.b16 %v2391, %v2391
        %v2408 = vpack.c.b16 %v2392, %v2392
        %v2409 = vpack.c.b16 %v2393, %v2393
        %v2410 = vpack.c.b16 %v2394, %v2394
        %v2411 = vpack.c.b16 %v2395, %v2395
        %s2428 = scalar_lea.vmem %s389, 128 [#allocation14]
        %2429 = vst.msk [vmem:[%s2428] sm:$0xf] %vm1870, %v2396
        %2430 = vst.msk [vmem:[%s2428 + $0x4] sm:$0xf] %vm1870, %v2397
        %2431 = vst.msk [vmem:[%s2428 + $0x8] sm:$0xf] %vm1870, %v2398
        %2432 = vst.msk [vmem:[%s2428 + $0xc] sm:$0xf] %vm1870, %v2399
        %2433 = vst.msk [vmem:[%s2428 + $0x10] sm:$0xf] %vm1870, %v2400
        %2434 = vst.msk [vmem:[%s2428 + $0x14] sm:$0xf] %vm1870, %v2401
        %2435 = vst.msk [vmem:[%s2428 + $0x18] sm:$0xf] %vm1870, %v2402
        %2436 = vst.msk [vmem:[%s2428 + $0x1c] sm:$0xf] %vm1870, %v2403
        %2437 = vst.msk [vmem:[%s2428 + $0x20] sm:$0xf] %vm1870, %v2404
        %2438 = vst.msk [vmem:[%s2428 + $0x24] sm:$0xf] %vm1870, %v2405
        %2439 = vst.msk [vmem:[%s2428 + $0x28] sm:$0xf] %vm1870, %v2406
        %2440 = vst.msk [vmem:[%s2428 + $0x2c] sm:$0xf] %vm1870, %v2407
        %2441 = vst.msk [vmem:[%s2428 + $0x30] sm:$0xf] %vm1870, %v2408
        %2442 = vst.msk [vmem:[%s2428 + $0x34] sm:$0xf] %vm1870, %v2409
        %2443 = vst.msk [vmem:[%s2428 + $0x38] sm:$0xf] %vm1870, %v2410
        %2444 = vst.msk [vmem:[%s2428 + $0x3c] sm:$0xf] %vm1870, %v2411
        %2445 = vrot.lane.b32.xlu0 %v2250, 64
        %v2446 = vpop.permute.xlu0 %2445
        %2447 = vrot.lane.b32.xlu0 %v2251, 64
        %v2448 = vpop.permute.xlu0 %2447
        %2449 = vrot.lane.b32.xlu0 %v2252, 64
        %v2450 = vpop.permute.xlu0 %2449
        %2451 = vrot.lane.b32.xlu0 %v2253, 64
        %v2452 = vpop.permute.xlu0 %2451
        %2453 = vrot.lane.b32.xlu0 %v2254, 64
        %v2454 = vpop.permute.xlu0 %2453
        %2455 = vrot.lane.b32.xlu0 %v2255, 64
        %v2456 = vpop.permute.xlu0 %2455
        %2457 = vrot.lane.b32.xlu0 %v2256, 64
        %v2458 = vpop.permute.xlu0 %2457
        %2459 = vrot.lane.b32.xlu0 %v2257, 64
        %v2460 = vpop.permute.xlu0 %2459
        %2461 = vrot.lane.b32.xlu0 %v2258, 64
        %v2462 = vpop.permute.xlu0 %2461
        %2463 = vrot.lane.b32.xlu0 %v2259, 64
        %v2464 = vpop.permute.xlu0 %2463
        %2465 = vrot.lane.b32.xlu0 %v2260, 64
        %v2466 = vpop.permute.xlu0 %2465
        %2467 = vrot.lane.b32.xlu0 %v2261, 64
        %v2468 = vpop.permute.xlu0 %2467
        %2469 = vrot.lane.b32.xlu0 %v2262, 64
        %v2470 = vpop.permute.xlu0 %2469
        %2471 = vrot.lane.b32.xlu0 %v2263, 64
        %v2472 = vpop.permute.xlu0 %2471
        %2473 = vrot.lane.b32.xlu0 %v2264, 64
        %v2474 = vpop.permute.xlu0 %2473
        %2475 = vrot.lane.b32.xlu0 %v2265, 64
        %v2476 = vpop.permute.xlu0 %2475
        %s2493 = scalar_lea.vmem %s375, 192 [#allocation11]
        %2494 = vst.msk [vmem:[%s2493] sm:$0xf] %vm1870, %v2446
        %2495 = vst.msk [vmem:[%s2493 + $0x4] sm:$0xf] %vm1870, %v2448
        %2496 = vst.msk [vmem:[%s2493 + $0x8] sm:$0xf] %vm1870, %v2450
        %2497 = vst.msk [vmem:[%s2493 + $0xc] sm:$0xf] %vm1870, %v2452
        %2498 = vst.msk [vmem:[%s2493 + $0x10] sm:$0xf] %vm1870, %v2454
        %2499 = vst.msk [vmem:[%s2493 + $0x14] sm:$0xf] %vm1870, %v2456
        %2500 = vst.msk [vmem:[%s2493 + $0x18] sm:$0xf] %vm1870, %v2458
        %2501 = vst.msk [vmem:[%s2493 + $0x1c] sm:$0xf] %vm1870, %v2460
        %2502 = vst.msk [vmem:[%s2493 + $0x20] sm:$0xf] %vm1870, %v2462
        %2503 = vst.msk [vmem:[%s2493 + $0x24] sm:$0xf] %vm1870, %v2464
        %2504 = vst.msk [vmem:[%s2493 + $0x28] sm:$0xf] %vm1870, %v2466
        %2505 = vst.msk [vmem:[%s2493 + $0x2c] sm:$0xf] %vm1870, %v2468
        %2506 = vst.msk [vmem:[%s2493 + $0x30] sm:$0xf] %vm1870, %v2470
        %2507 = vst.msk [vmem:[%s2493 + $0x34] sm:$0xf] %vm1870, %v2472
        %2508 = vst.msk [vmem:[%s2493 + $0x38] sm:$0xf] %vm1870, %v2474
        %2509 = vst.msk [vmem:[%s2493 + $0x3c] sm:$0xf] %vm1870, %v2476
        %2510 = vrot.lane.b32.xlu0 %v2323, 64
        %v2511 = vpop.permute.xlu0 %2510
        %2512 = vrot.lane.b32.xlu0 %v2324, 64
        %v2513 = vpop.permute.xlu0 %2512
        %2514 = vrot.lane.b32.xlu0 %v2325, 64
        %v2515 = vpop.permute.xlu0 %2514
        %2516 = vrot.lane.b32.xlu0 %v2326, 64
        %v2517 = vpop.permute.xlu0 %2516
        %2518 = vrot.lane.b32.xlu0 %v2327, 64
        %v2519 = vpop.permute.xlu0 %2518
        %2520 = vrot.lane.b32.xlu0 %v2328, 64
        %v2521 = vpop.permute.xlu0 %2520
        %2522 = vrot.lane.b32.xlu0 %v2329, 64
        %v2523 = vpop.permute.xlu0 %2522
        %2524 = vrot.lane.b32.xlu0 %v2330, 64
        %v2525 = vpop.permute.xlu0 %2524
        %2526 = vrot.lane.b32.xlu0 %v2331, 64
        %v2527 = vpop.permute.xlu0 %2526
        %2528 = vrot.lane.b32.xlu0 %v2332, 64
        %v2529 = vpop.permute.xlu0 %2528
        %2530 = vrot.lane.b32.xlu0 %v2333, 64
        %v2531 = vpop.permute.xlu0 %2530
        %2532 = vrot.lane.b32.xlu0 %v2334, 64
        %v2533 = vpop.permute.xlu0 %2532
        %2534 = vrot.lane.b32.xlu0 %v2335, 64
        %v2535 = vpop.permute.xlu0 %2534
        %2536 = vrot.lane.b32.xlu0 %v2336, 64
        %v2537 = vpop.permute.xlu0 %2536
        %2538 = vrot.lane.b32.xlu0 %v2337, 64
        %v2539 = vpop.permute.xlu0 %2538
        %2540 = vrot.lane.b32.xlu0 %v2338, 64
        %v2541 = vpop.permute.xlu0 %2540
        %s2558 = scalar_lea.vmem %s382, 192 [#allocation12]
        %2559 = vst.msk [vmem:[%s2558] sm:$0xf] %vm1870, %v2511
        %2560 = vst.msk [vmem:[%s2558 + $0x4] sm:$0xf] %vm1870, %v2513
        %2561 = vst.msk [vmem:[%s2558 + $0x8] sm:$0xf] %vm1870, %v2515
        %2562 = vst.msk [vmem:[%s2558 + $0xc] sm:$0xf] %vm1870, %v2517
        %2563 = vst.msk [vmem:[%s2558 + $0x10] sm:$0xf] %vm1870, %v2519
        %2564 = vst.msk [vmem:[%s2558 + $0x14] sm:$0xf] %vm1870, %v2521
        %2565 = vst.msk [vmem:[%s2558 + $0x18] sm:$0xf] %vm1870, %v2523
        %2566 = vst.msk [vmem:[%s2558 + $0x1c] sm:$0xf] %vm1870, %v2525
        %2567 = vst.msk [vmem:[%s2558 + $0x20] sm:$0xf] %vm1870, %v2527
        %2568 = vst.msk [vmem:[%s2558 + $0x24] sm:$0xf] %vm1870, %v2529
        %2569 = vst.msk [vmem:[%s2558 + $0x28] sm:$0xf] %vm1870, %v2531
        %2570 = vst.msk [vmem:[%s2558 + $0x2c] sm:$0xf] %vm1870, %v2533
        %2571 = vst.msk [vmem:[%s2558 + $0x30] sm:$0xf] %vm1870, %v2535
        %2572 = vst.msk [vmem:[%s2558 + $0x34] sm:$0xf] %vm1870, %v2537
        %2573 = vst.msk [vmem:[%s2558 + $0x38] sm:$0xf] %vm1870, %v2539
        %2574 = vst.msk [vmem:[%s2558 + $0x3c] sm:$0xf] %vm1870, %v2541
        %2575 = vrot.lane.b32.xlu0 %v2396, 64
        %v2576 = vpop.permute.xlu0 %2575
        %2577 = vrot.lane.b32.xlu0 %v2397, 64
        %v2578 = vpop.permute.xlu0 %2577
        %2579 = vrot.lane.b32.xlu0 %v2398, 64
        %v2580 = vpop.permute.xlu0 %2579
        %2581 = vrot.lane.b32.xlu0 %v2399, 64
        %v2582 = vpop.permute.xlu0 %2581
        %2583 = vrot.lane.b32.xlu0 %v2400, 64
        %v2584 = vpop.permute.xlu0 %2583
        %2585 = vrot.lane.b32.xlu0 %v2401, 64
        %v2586 = vpop.permute.xlu0 %2585
        %2587 = vrot.lane.b32.xlu0 %v2402, 64
        %v2588 = vpop.permute.xlu0 %2587
        %2589 = vrot.lane.b32.xlu0 %v2403, 64
        %v2590 = vpop.permute.xlu0 %2589
        %2591 = vrot.lane.b32.xlu0 %v2404, 64
        %v2592 = vpop.permute.xlu0 %2591
        %2593 = vrot.lane.b32.xlu0 %v2405, 64
        %v2594 = vpop.permute.xlu0 %2593
        %2595 = vrot.lane.b32.xlu0 %v2406, 64
        %v2596 = vpop.permute.xlu0 %2595
        %2597 = vrot.lane.b32.xlu0 %v2407, 64
        %v2598 = vpop.permute.xlu0 %2597
        %2599 = vrot.lane.b32.xlu0 %v2408, 64
        %v2600 = vpop.permute.xlu0 %2599
        %2601 = vrot.lane.b32.xlu0 %v2409, 64
        %v2602 = vpop.permute.xlu0 %2601
        %2603 = vrot.lane.b32.xlu0 %v2410, 64
        %v2604 = vpop.permute.xlu0 %2603
        %2605 = vrot.lane.b32.xlu0 %v2411, 64
        %v2606 = vpop.permute.xlu0 %2605
        %s2623 = scalar_lea.vmem %s389, 192 [#allocation14]
        %2624 = vst.msk [vmem:[%s2623] sm:$0xf] %vm1870, %v2576
        %2625 = vst.msk [vmem:[%s2623 + $0x4] sm:$0xf] %vm1870, %v2578
        %2626 = vst.msk [vmem:[%s2623 + $0x8] sm:$0xf] %vm1870, %v2580
        %2627 = vst.msk [vmem:[%s2623 + $0xc] sm:$0xf] %vm1870, %v2582
        %2628 = vst.msk [vmem:[%s2623 + $0x10] sm:$0xf] %vm1870, %v2584
        %2629 = vst.msk [vmem:[%s2623 + $0x14] sm:$0xf] %vm1870, %v2586
        %2630 = vst.msk [vmem:[%s2623 + $0x18] sm:$0xf] %vm1870, %v2588
        %2631 = vst.msk [vmem:[%s2623 + $0x1c] sm:$0xf] %vm1870, %v2590
        %2632 = vst.msk [vmem:[%s2623 + $0x20] sm:$0xf] %vm1870, %v2592
        %2633 = vst.msk [vmem:[%s2623 + $0x24] sm:$0xf] %vm1870, %v2594
        %2634 = vst.msk [vmem:[%s2623 + $0x28] sm:$0xf] %vm1870, %v2596
        %2635 = vst.msk [vmem:[%s2623 + $0x2c] sm:$0xf] %vm1870, %v2598
        %2636 = vst.msk [vmem:[%s2623 + $0x30] sm:$0xf] %vm1870, %v2600
        %2637 = vst.msk [vmem:[%s2623 + $0x34] sm:$0xf] %vm1870, %v2602
        %2638 = vst.msk [vmem:[%s2623 + $0x38] sm:$0xf] %vm1870, %v2604
        %2639 = vst.msk [vmem:[%s2623 + $0x3c] sm:$0xf] %vm1870, %v2606
        %s2640 = sand.u32 %s164, 1
        %s2641 = scalar_lea.sflag [#allocation4], %s2640
        %s2642 = sand.u32 %s164, 1
        %s2643 = smul.addr %s2642, 256
        %s2644 = scalar_lea.vmem [#allocation11], %s2643
        %s2645 = sand.u32 %s30, 1
        %s2646 = scalar_lea.sflag [#allocation13], %s2645
        %s2647 = sand.u32 %s192, 1
        %s2648 = smul.addr %s2647, 256
        %s2649 = scalar_lea.vmem [#allocation12], %s2648
        %s2650 = sand.u32 %s30, 1
        %s2651 = scalar_lea.sflag [#allocation13], %s2650
        %s2652 = sand.u32 %s220, 1
        %s2653 = smul.addr %s2652, 256
        %s2654 = scalar_lea.vmem [#allocation14], %s2653
        // Predicated region
        $region61: #{tpu_custom_call.1} parent=39 // pred_check
          %p2655 = pneg %p174
        $region62: #{tpu_custom_call.1} parent=39 // pred_check_branch
          %2657 = sbr.rel (%p2655) target = $region64
        $region63: #{tpu_custom_call.1} parent=39 // pred_region
          #allocation16 [shape = 'u32[6]{0}', space=smem, size = 0x18, scoped, tag = 'DMA stride descriptor']
          %s2658 = smul.u32 16, %s35
          %s2660 = ssub.s32 4096, 4096
          %2661 = vsyncadd %s2641, %s2660
          %s2662 = smul.addr %s34, 128
          %s2663 = sadd.s32 %s2658, %s2662
          %s2664 = smul.addr %s2663, 64
          %s2665 = scalar_lea.hbm %s5, %s2664
          %s2667 = sshll.u32 1, 14
          %s2668 = sxor.u32 4294967295, %s2667
          %s2671 = sshll.u32 7, 18
          %s2672 = sxor.u32 4294967295, %s2671
          %s2673 = sand.u32 0, %s2672
          %s2675 = sor.u32 %s2673, 0
          %s2677 = sshll.u32 3, 24
          %s2678 = sxor.u32 4294967295, %s2677
          %s2679 = sand.u32 %s2675, %s2678
          %s2681 = sor.u32 %s2679, 0
          %s2682 = sshll.u32 %s2644, 4
          %s2683 = int_to_ptr.vmem [resolvable:$true] %s2682
          %2689 = sst [smem:[#allocation16]] 1024
          %s2690 = scalar_lea.smem [#allocation16], 1
          %2691 = sst [smem:[%s2690]] 2048
          %s2692 = scalar_lea.smem [#allocation16], 2
          %2693 = sst [smem:[%s2692]] 16
          %s2694 = scalar_lea.smem [#allocation16], 3
          %2695 = sst [smem:[%s2694]] 64
          %s2696 = scalar_lea.smem [#allocation16], 4
          %2697 = sst [smem:[%s2696]] 64
          %s2698 = scalar_lea.smem [#allocation16], 5
          %2699 = sst [smem:[%s2698]] 4
          %2701 = dma.general %s2683, 4096, %s2665, %s2641, [#allocation15], [#allocation16], %s2681, 0
        $region64: #{tpu_custom_call.1} parent=39 // pred_fallthru
          _
        // Predicated region
        $region65: #{tpu_custom_call.1} parent=39 // pred_check
          %p2702 = pneg %p202
        $region66: #{tpu_custom_call.1} parent=39 // pred_check_branch
          %2704 = sbr.rel (%p2702) target = $region68
        $region67: #{tpu_custom_call.1} parent=39 // pred_region
          #allocation18 [shape = 'u32[6]{0}', space=smem, size = 0x18, scoped, tag = 'DMA stride descriptor']
          %s2705 = smul.u32 16, %s35
          %s2707 = ssub.s32 4096, 4096
          %2708 = vsyncadd %s2646, %s2707
          %s2709 = smul.addr %s34, 128
          %s2710 = sadd.s32 %s2705, %s2709
          %s2711 = smul.addr %s2710, 64
          %s2712 = scalar_lea.hbm %s6, %s2711
          %s2714 = sshll.u32 1, 14
          %s2715 = sxor.u32 4294967295, %s2714
          %s2718 = sshll.u32 7, 18
          %s2719 = sxor.u32 4294967295, %s2718
          %s2720 = sand.u32 0, %s2719
          %s2722 = sor.u32 %s2720, 0
          %s2724 = sshll.u32 3, 24
          %s2725 = sxor.u32 4294967295, %s2724
          %s2726 = sand.u32 %s2722, %s2725
          %s2728 = sor.u32 %s2726, 0
          %s2729 = sshll.u32 %s2649, 4
          %s2730 = int_to_ptr.vmem [resolvable:$true] %s2729
          %2736 = sst [smem:[#allocation18]] 1024
          %s2737 = scalar_lea.smem [#allocation18], 1
          %2738 = sst [smem:[%s2737]] 2048
          %s2739 = scalar_lea.smem [#allocation18], 2
          %2740 = sst [smem:[%s2739]] 16
          %s2741 = scalar_lea.smem [#allocation18], 3
          %2742 = sst [smem:[%s2741]] 64
          %s2743 = scalar_lea.smem [#allocation18], 4
          %2744 = sst [smem:[%s2743]] 64
          %s2745 = scalar_lea.smem [#allocation18], 5
          %2746 = sst [smem:[%s2745]] 4
          %2748 = dma.general %s2730, 4096, %s2712, %s2646, [#allocation17], [#allocation18], %s2728, 0
        $region68: #{tpu_custom_call.1} parent=39 // pred_fallthru
          _
        // Predicated region
        $region69: #{tpu_custom_call.1} parent=39 // pred_check
          %p2749 = pneg %p230
        $region70: #{tpu_custom_call.1} parent=39 // pred_check_branch
          %2751 = sbr.rel (%p2749) target = $region72
        $region71: #{tpu_custom_call.1} parent=39 // pred_region
          #allocation20 [shape = 'u32[6]{0}', space=smem, size = 0x18, scoped, tag = 'DMA stride descriptor']
          %s2752 = smul.u32 16, %s35
          %s2754 = ssub.s32 4096, 4096
          %2755 = vsyncadd %s2651, %s2754
          %s2756 = smul.addr %s34, 128
          %s2757 = sadd.s32 %s2752, %s2756
          %s2758 = smul.addr %s2757, 64
          %s2759 = scalar_lea.hbm %s7, %s2758
          %s2761 = sshll.u32 1, 14
          %s2762 = sxor.u32 4294967295, %s2761
          %s2765 = sshll.u32 7, 18
          %s2766 = sxor.u32 4294967295, %s2765
          %s2767 = sand.u32 0, %s2766
          %s2769 = sor.u32 %s2767, 0
          %s2771 = sshll.u32 3, 24
          %s2772 = sxor.u32 4294967295, %s2771
          %s2773 = sand.u32 %s2769, %s2772
          %s2775 = sor.u32 %s2773, 0
          %s2776 = sshll.u32 %s2654, 4
          %s2777 = int_to_ptr.vmem [resolvable:$true] %s2776
          %2783 = sst [smem:[#allocation20]] 1024
          %s2784 = scalar_lea.smem [#allocation20], 1
          %2785 = sst [smem:[%s2784]] 2048
          %s2786 = scalar_lea.smem [#allocation20], 2
          %2787 = sst [smem:[%s2786]] 16
          %s2788 = scalar_lea.smem [#allocation20], 3
          %2789 = sst [smem:[%s2788]] 64
          %s2790 = scalar_lea.smem [#allocation20], 4
          %2791 = sst [smem:[%s2790]] 64
          %s2792 = scalar_lea.smem [#allocation20], 5
          %2793 = sst [smem:[%s2792]] 4
          %2795 = dma.general %s2777, 4096, %s2759, %s2651, [#allocation19], [#allocation20], %s2775, 0
        $region72: #{tpu_custom_call.1} parent=39 // pred_fallthru
          _
      $region40: #{tpu_custom_call.1} parent=5 // pred_fallthru
        _
      %p2796 = scmp.le.s32.totalorder 2, %s25
      // Predicated region
      $region73: #{tpu_custom_call.1} parent=5 // pred_check
        %p2797 = pneg %p2796
      $region74: #{tpu_custom_call.1} parent=5 // pred_check_branch
        %2799 = sbr.rel (%p2797) target = $region76
      $region75: #{tpu_custom_call.1} parent=5 // pred_region
        %s2800 = ssub.s32 %s25, 2
        // Predicated region
        $region77: #{tpu_custom_call.1} parent=75 // pred_check
          %p2801 = pneg %p180
        $region78: #{tpu_custom_call.1} parent=75 // pred_check_branch
          %2803 = sbr.rel (%p2801) target = $region80
        $region79: #{tpu_custom_call.1} parent=75 // pred_region
          %s2804 = sand.u32 %s165, 1
          %s2805 = scalar_lea.sflag [#allocation4], %s2804
          %s2806 = sand.u32 %s165, 1
          %s2807 = smul.addr %s2806, 256
          %s2808 = scalar_lea.vmem [#allocation11], %s2807
          %2809 = dma.done %s2805, 4096
        $region80: #{tpu_custom_call.1} parent=75 // pred_fallthru
          _
        // Predicated region
        $region81: #{tpu_custom_call.1} parent=75 // pred_check
          %p2810 = pneg %p208
        $region82: #{tpu_custom_call.1} parent=75 // pred_check_branch
          %2812 = sbr.rel (%p2810) target = $region84
        $region83: #{tpu_custom_call.1} parent=75 // pred_region
          %s2813 = sand.u32 %s31, 1
          %s2814 = scalar_lea.sflag [#allocation13], %s2813
          %s2815 = sand.u32 %s193, 1
          %s2816 = smul.addr %s2815, 256
          %s2817 = scalar_lea.vmem [#allocation12], %s2816
          %2818 = dma.done %s2814, 4096
        $region84: #{tpu_custom_call.1} parent=75 // pred_fallthru
          _
        // Predicated region
        $region85: #{tpu_custom_call.1} parent=75 // pred_check
          %p2819 = pneg %p236
        $region86: #{tpu_custom_call.1} parent=75 // pred_check_branch
          %2821 = sbr.rel (%p2819) target = $region88
        $region87: #{tpu_custom_call.1} parent=75 // pred_region
          %s2822 = sand.u32 %s31, 1
          %s2823 = scalar_lea.sflag [#allocation13], %s2822
          %s2824 = sand.u32 %s221, 1
          %s2825 = smul.addr %s2824, 256
          %s2826 = scalar_lea.vmem [#allocation14], %s2825
          %2827 = dma.done %s2823, 4096
        $region88: #{tpu_custom_call.1} parent=75 // pred_fallthru
          _
      $region76: #{tpu_custom_call.1} parent=5 // pred_fallthru
        _
    $region6: #{tpu_custom_call.1} parent=1 // loop_footer
      %s29 = sadd.s32 1, %s25
    $region7: #{tpu_custom_call.1} parent=1 // loop_footer_branch
      %24 = sbr.rel target = $region3
    $region8: #{tpu_custom_call.1} parent=1 // loop_exit
      _
    %2828 = vsyncpa [#allocation3], 1
    %s2829 = scalar_lea.sflag [#allocation3], 1
    %2830 = vsyncpa %s2829, 1
    %2831 = vsyncpa [#allocation6], 1
    %2832 = vsyncpa [#allocation9], 1
    %2833 = vsyncpa [#allocation4], 1
    %s2834 = scalar_lea.sflag [#allocation4], 1
    %2835 = vsyncpa %s2834, 1
    %2836 = vsyncpa [#allocation13], 1
    %s2837 = scalar_lea.sflag [#allocation13], 1
    %2838 = vsyncpa %s2837, 1

</llo_original>
